<compile_context>
chip_gen: v6e
topology: v6e:2x2x1
jax: 0.10.0
libtpu: 0.0.40
codegen_flags: <defaults>
</compile_context>

<pallas_src>
import functools
import math

import jax
import jax.numpy as jnp
from jax.experimental import pallas as pl
from jax.experimental.pallas import tpu as pltpu


def _round_up(v, m):
    return ((v + m - 1) // m) * m


def _pad2d(a, rows, cols):
    return jnp.zeros((rows, cols), a.dtype).at[:a.shape[0], :a.shape[1]].set(a)


def _pad_row(v, cols):
    return jnp.zeros((1, cols), v.dtype).at[0, :v.shape[0]].set(v)


# --------------------------------------------------------------------------- #
# Tiled large-graph path: one SAGEConv layer, grid = (node tiles, K tiles).
# --------------------------------------------------------------------------- #
def _sage_tiled_kernel(a_ref, xk_ref, invdeg_ref, xrow_ref, wl_ref, wr_ref,
                       b_ref, out_ref, acc_ref, *, apply_relu):
    """a_ref: (TM, TK) bf16 counts; xk_ref: (TK, C); invdeg_ref: (TM, 1);
    xrow_ref: (TM, C); wl/wr: (C, O); b: (1, O); out: (TM, O); acc: (TM, C)."""
    k = pl.program_id(1)

    @pl.when(k == 0)
    def _():
        acc_ref[...] = jnp.zeros_like(acc_ref)

    # Partial neighbor sum for this K tile: (TM, TK) @ (TK, C) on the MXU.
    # bf16 integer counts upcast to f32 exactly, so accumulation matches f32.
    acc_ref[...] += jnp.dot(a_ref[...].astype(jnp.float32), xk_ref[...],
                            preferred_element_type=jnp.float32)

    @pl.when(k == pl.num_programs(1) - 1)
    def _():
        agg = acc_ref[...] * invdeg_ref[...]        # exact f32 mean (VPU)
        out = jnp.dot(agg, wl_ref[...], preferred_element_type=jnp.float32)
        out += jnp.dot(xrow_ref[...], wr_ref[...],
                       preferred_element_type=jnp.float32)
        out += b_ref[...]
        if apply_relu:
            out = jnp.maximum(out, 0.0)
        out_ref[...] = out.astype(out_ref.dtype)


def _sage_layer_tiled(a_counts, inv_deg, x, wl, wr, b2d, *, apply_relu, tm, tk):
    n_pad, c = x.shape
    o_pad = wl.shape[1]
    grid = (n_pad // tm, n_pad // tk)   # node tiles (parallel) x K (reduction)

    cost = pl.CostEstimate(
        flops=2 * n_pad * (n_pad * c + 2 * c * o_pad),
        transcendentals=0,
        bytes_accessed=(2 * n_pad * n_pad                     # bf16 A (dominant)
                        + 4 * n_pad * c * (n_pad // tm)       # X K-stream
                        + 4 * n_pad * (c + o_pad + 1)
                        + 4 * (2 * c + 1) * o_pad),
    )

    kernel = functools.partial(_sage_tiled_kernel, apply_relu=apply_relu)
    return pl.pallas_call(
        kernel,
        out_shape=jax.ShapeDtypeStruct((n_pad, o_pad), jnp.float32),
        grid_spec=pltpu.PrefetchScalarGridSpec(
            num_scalar_prefetch=0,
            grid=grid,
            in_specs=[
                pl.BlockSpec((tm, tk), lambda i, k: (i, k)),     # A counts bf16
                pl.BlockSpec((tk, c), lambda i, k: (k, 0)),      # X, K tile
                pl.BlockSpec((tm, 1), lambda i, k: (i, 0)),      # 1/deg rows
                pl.BlockSpec((tm, c), lambda i, k: (i, 0)),      # X root rows
                pl.BlockSpec((c, o_pad), lambda i, k: (0, 0)),   # W_l (resident)
                pl.BlockSpec((c, o_pad), lambda i, k: (0, 0)),   # W_r (resident)
                pl.BlockSpec((1, o_pad), lambda i, k: (0, 0)),   # bias (resident)
            ],
            out_specs=pl.BlockSpec((tm, o_pad), lambda i, k: (i, 0)),
            scratch_shapes=[pltpu.VMEM((tm, c), jnp.float32)],
        ),
        compiler_params=pltpu.CompilerParams(
            # Node tiles are independent -> megacore sharding; K axis carries
            # the accumulator so it must stay "arbitrary" (and is innermost).
            dimension_semantics=("parallel", "arbitrary"),
            vmem_limit_bytes=48 * 1024 * 1024,
        ),
        cost_estimate=cost,
    )(a_counts, x, inv_deg, x, wl, wr, b2d)


# --------------------------------------------------------------------------- #
# Fused small-graph path: both layers in one VMEM-resident pallas_call.
# --------------------------------------------------------------------------- #
def _fused_kernel(a_ref, invdeg_ref, x_ref, w1l_ref, w1r_ref, b1_ref,
                  w2l_ref, w2r_ref, b2_ref, out_ref):
    a = a_ref[...].astype(jnp.float32)      # exact upcast of bf16 counts
    inv = invdeg_ref[...]
    x = x_ref[...]
    # Layer 1: SAGEConv + ReLU.
    agg = jnp.dot(a, x, preferred_element_type=jnp.float32) * inv
    h = jnp.dot(agg, w1l_ref[...], preferred_element_type=jnp.float32)
    h += jnp.dot(x, w1r_ref[...], preferred_element_type=jnp.float32)
    h += b1_ref[...]
    h = jnp.maximum(h, 0.0)
    # Layer 2: SAGEConv (hidden activations never leave VMEM).
    agg = jnp.dot(a, h, preferred_element_type=jnp.float32) * inv
    out = jnp.dot(agg, w2l_ref[...], preferred_element_type=jnp.float32)
    out += jnp.dot(h, w2r_ref[...], preferred_element_type=jnp.float32)
    out += b2_ref[...]
    out_ref[...] = out.astype(out_ref.dtype)


def _encoder_fused(a_counts, inv_deg, x, w1l, w1r, b1, w2l, w2r, b2):
    n_pad, c = x.shape
    hid_pad = w1l.shape[1]
    out_pad = w2l.shape[1]

    def full(shape):
        return pl.BlockSpec(shape, lambda i: (0, 0))

    return pl.pallas_call(
        _fused_kernel,
        out_shape=jax.ShapeDtypeStruct((n_pad, out_pad), jnp.float32),
        grid_spec=pltpu.PrefetchScalarGridSpec(
            num_scalar_prefetch=0,
            grid=(1,),
            in_specs=[
                full((n_pad, n_pad)),        # A counts (bf16), resident
                full((n_pad, 1)),            # 1/deg
                full((n_pad, c)),            # X
                full((c, hid_pad)), full((c, hid_pad)), full((1, hid_pad)),
                full((hid_pad, out_pad)), full((hid_pad, out_pad)),
                full((1, out_pad)),
            ],
            out_specs=full((n_pad, out_pad)),
        ),
        compiler_params=pltpu.CompilerParams(
            dimension_semantics=("arbitrary",),
            vmem_limit_bytes=48 * 1024 * 1024,
        ),
    )(a_counts, inv_deg, x, w1l, w1r, b1, w2l, w2r, b2)


# --------------------------------------------------------------------------- #
# Encoder wrapper
# --------------------------------------------------------------------------- #
def edge_gnn_encoder(x, edge_index, params, *, tile_m=512, tile_k=2048,
                     fused_max_nodes=1024, use_fused=None):
    """Forward pass of EdgeGNNEncoder: SAGEConv -> ReLU -> SAGEConv.

    x: (N, C) float32; edge_index: (2, E) int32 with row 0 = source,
    row 1 = target (messages flow source -> target, mean-aggregated at target).
    """
    (w1l, w1r, b1), (w2l, w2r, b2) = params
    n, c_in = x.shape
    hid = w1l.shape[1]
    out_c = w2l.shape[1]
    hid_pad = _round_up(hid, 128)
    out_pad = _round_up(out_c, 128)

    # Lane-dense weights/bias: zero-pad output-channel dims to 128 so stores
    # are unmasked 128-lane vst; padded columns stay exactly zero throughout.
    w1l_p = _pad2d(w1l, c_in, hid_pad)
    w1r_p = _pad2d(w1r, c_in, hid_pad)
    b1_p = _pad_row(b1, hid_pad)
    w2l_p = _pad2d(w2l, hid_pad, out_pad)
    w2r_p = _pad2d(w2r, hid_pad, out_pad)
    b2_p = _pad_row(b2, out_pad)

    if use_fused is None:
        use_fused = n <= fused_max_nodes

    if use_fused:
        tm = tk = None
        n_pad = _round_up(max(n, 8), 8)
    else:
        tk = max(128, min(_round_up(tile_k, 128), _round_up(n, 128)))
        tm = max(8, min(_round_up(tile_m, 8), _round_up(n, 8)))
        n_pad = _round_up(max(n, 8), math.lcm(tm, tk))

    # Dense mean adjacency split into exact bf16 integer counts (halves the
    # dominant HBM stream vs f32) + an f32 1/in-degree row scale applied in
    # the kernel.  Exact as long as edge multiplicity < 256.  Padded rows /
    # columns are all-zero so they never affect real nodes.
    # TODO(synk): the edge_index scatter itself (data-dependent) has no clean
    # Pallas TPU equivalent; it stays in plain JAX/XLA and is O(N^2) memory.
    src = edge_index[0]
    dst = edge_index[1]
    counts = jnp.zeros((n_pad, n_pad), jnp.float32).at[dst, src].add(1.0)
    deg = counts.sum(axis=1, keepdims=True)
    inv_deg = 1.0 / jnp.maximum(deg, 1.0)       # isolated nodes aggregate to 0
    a_counts = counts.astype(jnp.bfloat16)      # exact small-integer counts

    x_pad = jnp.zeros((n_pad, c_in), jnp.float32).at[:n].set(x)

    if use_fused:
        out = _encoder_fused(a_counts, inv_deg, x_pad,
                             w1l_p, w1r_p, b1_p, w2l_p, w2r_p, b2_p)
    else:
        h = _sage_layer_tiled(a_counts, inv_deg, x_pad, w1l_p, w1r_p, b1_p,
                              apply_relu=True, tm=tm, tk=tk)
        out = _sage_layer_tiled(a_counts, inv_deg, h, w2l_p, w2r_p, b2_p,
                                apply_relu=False, tm=tm, tk=tk)
    return out[:n, :out_c]


# --------------------------------------------------------------------------- #
# Synthetic params (torch_geometric SAGEConv layout) + plain-JAX reference
# --------------------------------------------------------------------------- #
def _init_params(key, in_channels, hidden_channels, out_channels):
    """SAGEConv(in, out): lin_l (out, in) weight + bias (neighbor branch) and
    lin_r (out, in) weight, no bias (root branch).  Transposed to (in, out)."""
    ks = jax.random.split(key, 6)

    def lin_t(k, fan_in, fan_out, scale=0.1):
        return (jax.random.normal(k, (fan_out, fan_in), jnp.float32) * scale).T

    w1l = lin_t(ks[0], in_channels, hidden_channels)
    w1r = lin_t(ks[1], in_channels, hidden_channels)
    b1 = jax.random.normal(ks[2], (hidden_channels,), jnp.float32) * 0.1
    w2l = lin_t(ks[3], hidden_channels, out_channels)
    w2r = lin_t(ks[4], hidden_channels, out_channels)
    b2 = jax.random.normal(ks[5], (out_channels,), jnp.float32) * 0.1
    return (w1l, w1r, b1), (w2l, w2r, b2)


def _sage_ref(x, edge_index, wl, wr, b):
    src, dst = edge_index[0], edge_index[1]
    n = x.shape[0]
    agg_sum = jnp.zeros((n, x.shape[1]), jnp.float32).at[dst].add(x[src])
    deg = jnp.zeros((n,), jnp.float32).at[dst].add(1.0)
    agg = agg_sum / jnp.maximum(deg, 1.0)[:, None]
    return agg @ wl + x @ wr + b


def _encoder_ref(x, edge_index, params):
    (w1l, w1r, b1), (w2l, w2r, b2) = params
    h = jnp.maximum(_sage_ref(x, edge_index, w1l, w1r, b1), 0.0)
    return _sage_ref(h, edge_index, w2l, w2r, b2)


if __name__ == "__main__":
    # Small graph consistent with the module: 200 nodes, 800 directed edges.
    N, E = 200, 800
    IN_CHANNELS, HIDDEN_CHANNELS, OUT_CHANNELS = 16, 32, 16

    key = jax.random.PRNGKey(0)
    kx, ke1, ke2, kp = jax.random.split(key, 4)
    x = jax.random.normal(kx, (N, IN_CHANNELS), jnp.float32)
    edge_index = jnp.stack([
        jax.random.randint(ke1, (E,), 0, N, dtype=jnp.int32),   # sources
        jax.random.randint(ke2, (E,), 0, N, dtype=jnp.int32),   # targets
    ])
    params = _init_params(kp, IN_CHANNELS, HIDDEN_CHANNELS, OUT_CHANNELS)
    ref = _encoder_ref(x, edge_index, params)

    # Small-graph path: both layers fused in one VMEM-resident pallas_call.
    out_fused = jax.block_until_ready(edge_gnn_encoder(x, edge_index, params))
    assert out_fused.shape == (N, OUT_CHANNELS)
    assert jnp.allclose(out_fused, ref, atol=1e-4, rtol=1e-4), float(
        jnp.max(jnp.abs(out_fused - ref)))

    # Large-graph path (forced, with small tiles so the 200-node graph still
    # exercises the node x K grid, the accumulator init and the epilogue).
    out_tiled = jax.block_until_ready(
        edge_gnn_encoder(x, edge_index, params, use_fused=False,
                         tile_m=64, tile_k=128))
    assert out_tiled.shape == (N, OUT_CHANNELS)
    assert jnp.allclose(out_tiled, ref, atol=1e-4, rtol=1e-4), float(
        jnp.max(jnp.abs(out_tiled - ref)))

    print("KERNEL_OK")
</pallas_src>

<mosaic_0001>
module attributes {stable_mosaic.version = 11 : i64} {
  func.func @_fused_kernel(%arg0: i32, %arg1: memref<200x200xbf16, #tpu.memory_space<vmem>>, %arg2: memref<200x1xf32, #tpu.memory_space<vmem>>, %arg3: memref<200x16xf32, #tpu.memory_space<vmem>>, %arg4: memref<16x128xf32, #tpu.memory_space<vmem>>, %arg5: memref<16x128xf32, #tpu.memory_space<vmem>>, %arg6: memref<1x128xf32, #tpu.memory_space<vmem>>, %arg7: memref<128x128xf32, #tpu.memory_space<vmem>>, %arg8: memref<128x128xf32, #tpu.memory_space<vmem>>, %arg9: memref<1x128xf32, #tpu.memory_space<vmem>>, %arg10: memref<200x128xf32, #tpu.memory_space<vmem>>) attributes {dimension_semantics = [#tpu.dimension_semantics<arbitrary>], iteration_bounds = array<i64: 1>, scalar_prefetch = 0 : i64, scratch_operands = 0 : i64, tpu.core_type = #tpu.core_type<tc>, window_params = [{pipeline_mode = #tpu.pipeline_mode<synchronous>, transform_indices = @transform_0, window_bounds = array<i64: 200, 200>}, {pipeline_mode = #tpu.pipeline_mode<synchronous>, transform_indices = @transform_1, window_bounds = array<i64: 200, 1>}, {pipeline_mode = #tpu.pipeline_mode<synchronous>, transform_indices = @transform_2, window_bounds = array<i64: 200, 16>}, {pipeline_mode = #tpu.pipeline_mode<synchronous>, transform_indices = @transform_3, window_bounds = array<i64: 16, 128>}, {pipeline_mode = #tpu.pipeline_mode<synchronous>, transform_indices = @transform_4, window_bounds = array<i64: 16, 128>}, {pipeline_mode = #tpu.pipeline_mode<synchronous>, transform_indices = @transform_5, window_bounds = array<i64: 1, 128>}, {pipeline_mode = #tpu.pipeline_mode<synchronous>, transform_indices = @transform_6, window_bounds = array<i64: 128, 128>}, {pipeline_mode = #tpu.pipeline_mode<synchronous>, transform_indices = @transform_7, window_bounds = array<i64: 128, 128>}, {pipeline_mode = #tpu.pipeline_mode<synchronous>, transform_indices = @transform_8, window_bounds = array<i64: 1, 128>}, {pipeline_mode = #tpu.pipeline_mode<synchronous>, transform_indices = @transform_9, window_bounds = array<i64: 200, 128>}]} {
    %c0 = arith.constant 0 : index
    %c0_0 = arith.constant 0 : index
    %0 = vector.load %arg1[%c0, %c0_0] : memref<200x200xbf16, #tpu.memory_space<vmem>>, vector<200x200xbf16>
    %1 = arith.extf %0 : vector<200x200xbf16> to vector<200x200xf32>
    %c0_1 = arith.constant 0 : index
    %c0_2 = arith.constant 0 : index
    %2 = vector.load %arg2[%c0_1, %c0_2] : memref<200x1xf32, #tpu.memory_space<vmem>>, vector<200x1xf32>
    %c0_3 = arith.constant 0 : index
    %c0_4 = arith.constant 0 : index
    %3 = vector.load %arg3[%c0_3, %c0_4] : memref<200x16xf32, #tpu.memory_space<vmem>>, vector<200x16xf32>
    %cst = arith.constant dense<0.000000e+00> : vector<200x16xf32>
    %4 = tpu.matmul %1, %3, %cst {dimension_numbers = #tpu.dot_dimension_numbers<[1], [0], [0], [1], [0, 0, 1, 1], [], []>} : vector<200x200xf32>, vector<200x16xf32>, vector<200x16xf32> -> vector<200x16xf32>
    %5 = vector.broadcast %2 : vector<200x1xf32> to vector<200x16xf32>
    %6 = arith.mulf %4, %5 : vector<200x16xf32>
    %c0_5 = arith.constant 0 : index
    %c0_6 = arith.constant 0 : index
    %7 = vector.load %arg4[%c0_5, %c0_6] : memref<16x128xf32, #tpu.memory_space<vmem>>, vector<16x128xf32>
    %cst_7 = arith.constant dense<0.000000e+00> : vector<200x128xf32>
    %8 = tpu.matmul %6, %7, %cst_7 {dimension_numbers = #tpu.dot_dimension_numbers<[1], [0], [0], [1], [0, 0, 1, 1], [], []>} : vector<200x16xf32>, vector<16x128xf32>, vector<200x128xf32> -> vector<200x128xf32>
    %c0_8 = arith.constant 0 : index
    %c0_9 = arith.constant 0 : index
    %9 = vector.load %arg5[%c0_8, %c0_9] : memref<16x128xf32, #tpu.memory_space<vmem>>, vector<16x128xf32>
    %cst_10 = arith.constant dense<0.000000e+00> : vector<200x128xf32>
    %10 = tpu.matmul %3, %9, %cst_10 {dimension_numbers = #tpu.dot_dimension_numbers<[1], [0], [0], [1], [0, 0, 1, 1], [], []>} : vector<200x16xf32>, vector<16x128xf32>, vector<200x128xf32> -> vector<200x128xf32>
    %11 = arith.addf %8, %10 : vector<200x128xf32>
    %c0_11 = arith.constant 0 : index
    %c0_12 = arith.constant 0 : index
    %12 = vector.load %arg6[%c0_11, %c0_12] : memref<1x128xf32, #tpu.memory_space<vmem>>, vector<1x128xf32>
    %13 = vector.broadcast %12 : vector<1x128xf32> to vector<200x128xf32>
    %14 = arith.addf %11, %13 : vector<200x128xf32>
    %cst_13 = arith.constant 0.000000e+00 : f32
    %15 = vector.broadcast %cst_13 : f32 to vector<200x128xf32>
    %16 = arith.maximumf %14, %15 : vector<200x128xf32>
    %cst_14 = arith.constant dense<0.000000e+00> : vector<200x128xf32>
    %17 = tpu.matmul %1, %16, %cst_14 {dimension_numbers = #tpu.dot_dimension_numbers<[1], [0], [0], [1], [0, 0, 1, 1], [], []>} : vector<200x200xf32>, vector<200x128xf32>, vector<200x128xf32> -> vector<200x128xf32>
    %18 = vector.broadcast %2 : vector<200x1xf32> to vector<200x128xf32>
    %19 = arith.mulf %17, %18 : vector<200x128xf32>
    %c0_15 = arith.constant 0 : index
    %c0_16 = arith.constant 0 : index
    %20 = vector.load %arg7[%c0_15, %c0_16] : memref<128x128xf32, #tpu.memory_space<vmem>>, vector<128x128xf32>
    %cst_17 = arith.constant dense<0.000000e+00> : vector<200x128xf32>
    %21 = tpu.matmul %19, %20, %cst_17 {dimension_numbers = #tpu.dot_dimension_numbers<[1], [0], [0], [1], [0, 0, 1, 1], [], []>} : vector<200x128xf32>, vector<128x128xf32>, vector<200x128xf32> -> vector<200x128xf32>
    %c0_18 = arith.constant 0 : index
    %c0_19 = arith.constant 0 : index
    %22 = vector.load %arg8[%c0_18, %c0_19] : memref<128x128xf32, #tpu.memory_space<vmem>>, vector<128x128xf32>
    %cst_20 = arith.constant dense<0.000000e+00> : vector<200x128xf32>
    %23 = tpu.matmul %16, %22, %cst_20 {dimension_numbers = #tpu.dot_dimension_numbers<[1], [0], [0], [1], [0, 0, 1, 1], [], []>} : vector<200x128xf32>, vector<128x128xf32>, vector<200x128xf32> -> vector<200x128xf32>
    %24 = arith.addf %21, %23 : vector<200x128xf32>
    %c0_21 = arith.constant 0 : index
    %c0_22 = arith.constant 0 : index
    %25 = vector.load %arg9[%c0_21, %c0_22] : memref<1x128xf32, #tpu.memory_space<vmem>>, vector<1x128xf32>
    %26 = vector.broadcast %25 : vector<1x128xf32> to vector<200x128xf32>
    %27 = arith.addf %24, %26 : vector<200x128xf32>
    %c0_23 = arith.constant 0 : index
    %c0_24 = arith.constant 0 : index
    %28 = vector.load %arg10[%c0_23, %c0_24] : memref<200x128xf32, #tpu.memory_space<vmem>>, vector<200x128xf32>
    tpu.vector_store %arg10[%c0_23, %c0_24], %27 {strides = array<i32>} : memref<200x128xf32, #tpu.memory_space<vmem>>, vector<200x128xf32>,
    return
  }
  func.func @transform_0(%arg0: i32) -> (i32, i32) {
    %c0_i32 = arith.constant 0 : i32
    %c0_i32_0 = arith.constant 0 : i32
    %c0_i32_1 = arith.constant 0 : i32
    return %c0_i32, %c0_i32_0 : i32, i32
  }
  func.func @transform_1(%arg0: i32) -> (i32, i32) {
    %c0_i32 = arith.constant 0 : i32
    %c0_i32_0 = arith.constant 0 : i32
    %c0_i32_1 = arith.constant 0 : i32
    return %c0_i32, %c0_i32_0 : i32, i32
  }
  func.func @transform_2(%arg0: i32) -> (i32, i32) {
    %c0_i32 = arith.constant 0 : i32
    %c0_i32_0 = arith.constant 0 : i32
    %c0_i32_1 = arith.constant 0 : i32
    return %c0_i32, %c0_i32_0 : i32, i32
  }
  func.func @transform_3(%arg0: i32) -> (i32, i32) {
    %c0_i32 = arith.constant 0 : i32
    %c0_i32_0 = arith.constant 0 : i32
    %c0_i32_1 = arith.constant 0 : i32
    return %c0_i32, %c0_i32_0 : i32, i32
  }
  func.func @transform_4(%arg0: i32) -> (i32, i32) {
    %c0_i32 = arith.constant 0 : i32
    %c0_i32_0 = arith.constant 0 : i32
    %c0_i32_1 = arith.constant 0 : i32
    return %c0_i32, %c0_i32_0 : i32, i32
  }
  func.func @transform_5(%arg0: i32) -> (i32, i32) {
    %c0_i32 = arith.constant 0 : i32
    %c0_i32_0 = arith.constant 0 : i32
    %c0_i32_1 = arith.constant 0 : i32
    return %c0_i32, %c0_i32_0 : i32, i32
  }
  func.func @transform_6(%arg0: i32) -> (i32, i32) {
    %c0_i32 = arith.constant 0 : i32
    %c0_i32_0 = arith.constant 0 : i32
    %c0_i32_1 = arith.constant 0 : i32
    return %c0_i32, %c0_i32_0 : i32, i32
  }
  func.func @transform_7(%arg0: i32) -> (i32, i32) {
    %c0_i32 = arith.constant 0 : i32
    %c0_i32_0 = arith.constant 0 : i32
    %c0_i32_1 = arith.constant 0 : i32
    return %c0_i32, %c0_i32_0 : i32, i32
  }
  func.func @transform_8(%arg0: i32) -> (i32, i32) {
    %c0_i32 = arith.constant 0 : i32
    %c0_i32_0 = arith.constant 0 : i32
    %c0_i32_1 = arith.constant 0 : i32
    return %c0_i32, %c0_i32_0 : i32, i32
  }
  func.func @transform_9(%arg0: i32) -> (i32, i32) {
    %c0_i32 = arith.constant 0 : i32
    %c0_i32_0 = arith.constant 0 : i32
    %c0_i32_1 = arith.constant 0 : i32
    return %c0_i32, %c0_i32_0 : i32, i32
  }
}

</mosaic_0001>

<llo_original>
// kernel: tpu_custom_call.1
$region0: #{tpu_custom_call.1}
  #allocation0 [shape = 'u32[]', space=smem, size = 0x4, offset = 0x4, fixed_abs, tag = 'smem constant byte address 0x4 - core index']
  #allocation1 [shape = 'u32[144,128]{1,0:T(1,128)}', space=vmem, size = 0x12000, scoped, tag = 'internal scratch']
  %s0 = inlined_call_operand.vmem [shape: bf16[200,200], index: 0, kind: input, shape index: {}]
  %s1 = inlined_call_operand.vmem [shape: f32[200,1], index: 1, kind: input, shape index: {}]
  %s2 = inlined_call_operand.vmem [shape: f32[200,16], index: 2, kind: input, shape index: {}]
  %s3 = inlined_call_operand.vmem [shape: f32[16,128], index: 3, kind: input, shape index: {}]
  %s4 = inlined_call_operand.vmem [shape: f32[16,128], index: 4, kind: input, shape index: {}]
  %s5 = inlined_call_operand.vmem [shape: f32[1,128], index: 5, kind: input, shape index: {}]
  %s6 = inlined_call_operand.vmem [shape: f32[128,128], index: 6, kind: input, shape index: {}]
  %s7 = inlined_call_operand.hbm [shape: f32[128,128], index: 7, kind: input, shape index: {}]
  %s8 = inlined_call_operand.vmem [shape: f32[1,128], index: 8, kind: input, shape index: {}]
  %s9 = inlined_call_operand.hbm [shape: f32[200,128], index: 9, kind: output, shape index: {}]
  %s10 = sld [smem:[#allocation0]]
  $region50: #{tpu_custom_call.1} parent=0
    _
  %s12 = ssub.s32 1, %s10
  %s13 = scalar_select 0, %s12, %s10
  $region1: #{tpu_custom_call.1} parent=0
    #allocation2 [shape = 'u8[65536]{0}', space=vmem, size = 0x10000, scoped, tag = 'input window, operand 7, single buffered']
    #allocation3 [shape = 's32[1]{0}', space=sflag, size = 0x4, scoped, tag = 'scoped memory for tpu_custom_call.1']
    #allocation4 [shape = 's32[1]{0}', space=sflag, size = 0x4, scoped, tag = 'scoped memory for tpu_custom_call.1']
    #allocation5 [shape = 'u8[102400]{0}', space=vmem, size = 0x19000, scoped, tag = 'output window, operand 0, single buffered']
    %14 = vsyncpa [#allocation3], 0
    %15 = vsyncpa [#allocation4], 0
    // Predicated region
    $region2: #{tpu_custom_call.1} parent=1 // pred_check
      _
    $region3: #{tpu_custom_call.1} parent=1 // pred_check_branch
      %17 = sbr.rel (0) target = $region5
    $region4: #{tpu_custom_call.1} parent=1 // pred_region
      _
    $region5: #{tpu_custom_call.1} parent=1 // pred_fallthru
      _
    // Predicated region
    $region6: #{tpu_custom_call.1} parent=1 // pred_check
      _
    $region7: #{tpu_custom_call.1} parent=1 // pred_check_branch
      %19 = sbr.rel (0) target = $region9
    $region8: #{tpu_custom_call.1} parent=1 // pred_region
      _
    $region9: #{tpu_custom_call.1} parent=1 // pred_fallthru
      _
    // Predicated region
    $region10: #{tpu_custom_call.1} parent=1 // pred_check
      _
    $region11: #{tpu_custom_call.1} parent=1 // pred_check_branch
      %21 = sbr.rel (0) target = $region13
    $region12: #{tpu_custom_call.1} parent=1 // pred_region
      _
    $region13: #{tpu_custom_call.1} parent=1 // pred_fallthru
      _
    // Predicated region
    $region14: #{tpu_custom_call.1} parent=1 // pred_check
      _
    $region15: #{tpu_custom_call.1} parent=1 // pred_check_branch
      %23 = sbr.rel (0) target = $region17
    $region16: #{tpu_custom_call.1} parent=1 // pred_region
      _
    $region17: #{tpu_custom_call.1} parent=1 // pred_fallthru
      _
    // Predicated region
    $region18: #{tpu_custom_call.1} parent=1 // pred_check
      _
    $region19: #{tpu_custom_call.1} parent=1 // pred_check_branch
      %25 = sbr.rel (0) target = $region21
    $region20: #{tpu_custom_call.1} parent=1 // pred_region
      _
    $region21: #{tpu_custom_call.1} parent=1 // pred_fallthru
      _
    // Predicated region
    $region22: #{tpu_custom_call.1} parent=1 // pred_check
      _
    $region23: #{tpu_custom_call.1} parent=1 // pred_check_branch
      %27 = sbr.rel (0) target = $region25
    $region24: #{tpu_custom_call.1} parent=1 // pred_region
      _
    $region25: #{tpu_custom_call.1} parent=1 // pred_fallthru
      _
    // Predicated region
    $region26: #{tpu_custom_call.1} parent=1 // pred_check
      _
    $region27: #{tpu_custom_call.1} parent=1 // pred_check_branch
      %29 = sbr.rel (0) target = $region29
    $region28: #{tpu_custom_call.1} parent=1 // pred_region
      _
    $region29: #{tpu_custom_call.1} parent=1 // pred_fallthru
      _
    // Predicated region
    $region30: #{tpu_custom_call.1} parent=1 // pred_check
      _
    $region31: #{tpu_custom_call.1} parent=1 // pred_check_branch
      %31 = sbr.rel (0) target = $region33
    $region32: #{tpu_custom_call.1} parent=1 // pred_region
      %s33 = ssub.s32 2048, 2048
      %34 = vsyncadd [#allocation3], %s33
      %s35 = sshll.u32 [#allocation2], 4
      %s36 = int_to_ptr.vmem [resolvable:$true] %s35
      %41 = dma.hbm_to_vmem [thread:$0]  %s7, 2048, %s36, [#allocation3], 128, 128, 8
    $region33: #{tpu_custom_call.1} parent=1 // pred_fallthru
      _
    // Predicated region
    $region34: #{tpu_custom_call.1} parent=1 // pred_check
      _
    $region35: #{tpu_custom_call.1} parent=1 // pred_check_branch
      %43 = sbr.rel (0) target = $region37
    $region36: #{tpu_custom_call.1} parent=1 // pred_region
      _
    $region37: #{tpu_custom_call.1} parent=1 // pred_fallthru
      _
    // Predicated region
    $region38: #{tpu_custom_call.1} parent=1 // pred_check
      _
    $region39: #{tpu_custom_call.1} parent=1 // pred_check_branch
      %45 = sbr.rel (0) target = $region41
    $region40: #{tpu_custom_call.1} parent=1 // pred_region
      %46 = dma.done [#allocation3], 2048
    $region41: #{tpu_custom_call.1} parent=1 // pred_fallthru
      _
    %v47 = vld [vmem:[%s0] sm:$0xff]
    %v48 = vld [vmem:[%s0 + $0x8] sm:$0xff]
    %v49 = vld [vmem:[%s0 + $0x10] sm:$0xff]
    %v50 = vld [vmem:[%s0 + $0x18] sm:$0xff]
    %v51 = vld [vmem:[%s0 + $0x20] sm:$0xff]
    %v52 = vld [vmem:[%s0 + $0x28] sm:$0xff]
    %v53 = vld [vmem:[%s0 + $0x30] sm:$0xff]
    %v54 = vld [vmem:[%s0 + $0x38] sm:$0xff]
    %v55 = vld [vmem:[%s0 + $0x40] sm:$0xff]
    %v56 = vld [vmem:[%s0 + $0x48] sm:$0xff]
    %v57 = vld [vmem:[%s0 + $0x50] sm:$0xff]
    %v58 = vld [vmem:[%s0 + $0x58] sm:$0xff]
    %v59 = vld [vmem:[%s0 + $0x60] sm:$0xff]
    %v60 = vld [vmem:[%s0 + $0x68] sm:$0xff]
    %v61 = vld [vmem:[%s0 + $0x70] sm:$0xff]
    %v62 = vld [vmem:[%s0 + $0x78] sm:$0xff]
    %v63 = vld [vmem:[%s0 + $0x80] sm:$0xff]
    %v64 = vld [vmem:[%s0 + $0x88] sm:$0xff]
    %v65 = vld [vmem:[%s0 + $0x90] sm:$0xff]
    %v66 = vld [vmem:[%s0 + $0x98] sm:$0xff]
    %v67 = vld [vmem:[%s0 + $0xa0] sm:$0xff]
    %v68 = vld [vmem:[%s0 + $0xa8] sm:$0xff]
    %v69 = vld [vmem:[%s0 + $0xb0] sm:$0xff]
    %v70 = vld [vmem:[%s0 + $0xb8] sm:$0xff]
    %v71 = vld [vmem:[%s0 + $0xc0] sm:$0xff]
    %v72 = vunpack.c.l.bf16 %v47
    %v73 = vunpack.c.h.bf16 %v47
    %v74 = vunpack.c.l.bf16 %v48
    %v75 = vunpack.c.h.bf16 %v48
    %v76 = vunpack.c.l.bf16 %v49
    %v77 = vunpack.c.h.bf16 %v49
    %v78 = vunpack.c.l.bf16 %v50
    %v79 = vunpack.c.h.bf16 %v50
    %v80 = vunpack.c.l.bf16 %v51
    %v81 = vunpack.c.h.bf16 %v51
    %v82 = vunpack.c.l.bf16 %v52
    %v83 = vunpack.c.h.bf16 %v52
    %v84 = vunpack.c.l.bf16 %v53
    %v85 = vunpack.c.h.bf16 %v53
    %v86 = vunpack.c.l.bf16 %v54
    %v87 = vunpack.c.h.bf16 %v54
    %v88 = vunpack.c.l.bf16 %v55
    %v89 = vunpack.c.h.bf16 %v55
    %v90 = vunpack.c.l.bf16 %v56
    %v91 = vunpack.c.h.bf16 %v56
    %v92 = vunpack.c.l.bf16 %v57
    %v93 = vunpack.c.h.bf16 %v57
    %v94 = vunpack.c.l.bf16 %v58
    %v95 = vunpack.c.h.bf16 %v58
    %v96 = vunpack.c.l.bf16 %v59
    %v97 = vunpack.c.h.bf16 %v59
    %v98 = vunpack.c.l.bf16 %v60
    %v99 = vunpack.c.h.bf16 %v60
    %v100 = vunpack.c.l.bf16 %v61
    %v101 = vunpack.c.h.bf16 %v61
    %v102 = vunpack.c.l.bf16 %v62
    %v103 = vunpack.c.h.bf16 %v62
    %v104 = vunpack.c.l.bf16 %v63
    %v105 = vunpack.c.h.bf16 %v63
    %v106 = vunpack.c.l.bf16 %v64
    %v107 = vunpack.c.h.bf16 %v64
    %v108 = vunpack.c.l.bf16 %v65
    %v109 = vunpack.c.h.bf16 %v65
    %v110 = vunpack.c.l.bf16 %v66
    %v111 = vunpack.c.h.bf16 %v66
    %v112 = vunpack.c.l.bf16 %v67
    %v113 = vunpack.c.h.bf16 %v67
    %v114 = vunpack.c.l.bf16 %v68
    %v115 = vunpack.c.h.bf16 %v68
    %v116 = vunpack.c.l.bf16 %v69
    %v117 = vunpack.c.h.bf16 %v69
    %v118 = vunpack.c.l.bf16 %v70
    %v119 = vunpack.c.h.bf16 %v70
    %v120 = vunpack.c.l.bf16 %v71
    %v121 = vunpack.c.h.bf16 %v71
    %v122 = vld [vmem:[%s1] sm:$0xff]
    %v123 = vld [vmem:[%s1 + $0x8] sm:$0xff]
    %v124 = vld [vmem:[%s1 + $0x10] sm:$0xff]
    %v125 = vld [vmem:[%s1 + $0x18] sm:$0xff]
    %v126 = vld [vmem:[%s1 + $0x20] sm:$0xff]
    %v127 = vld [vmem:[%s1 + $0x28] sm:$0xff]
    %v128 = vld [vmem:[%s1 + $0x30] sm:$0xff]
    %v129 = vld [vmem:[%s1 + $0x38] sm:$0xff]
    %v130 = vld [vmem:[%s1 + $0x40] sm:$0xff]
    %v131 = vld [vmem:[%s1 + $0x48] sm:$0xff]
    %v132 = vld [vmem:[%s1 + $0x50] sm:$0xff]
    %v133 = vld [vmem:[%s1 + $0x58] sm:$0xff]
    %v134 = vld [vmem:[%s1 + $0x60] sm:$0xff]
    %v135 = vld [vmem:[%s1 + $0x68] sm:$0xff]
    %v136 = vld [vmem:[%s1 + $0x70] sm:$0xff]
    %v137 = vld [vmem:[%s1 + $0x78] sm:$0xff]
    %v138 = vld [vmem:[%s1 + $0x80] sm:$0xff]
    %v139 = vld [vmem:[%s1 + $0x88] sm:$0xff]
    %v140 = vld [vmem:[%s1 + $0x90] sm:$0xff]
    %v141 = vld [vmem:[%s1 + $0x98] sm:$0xff]
    %v142 = vld [vmem:[%s1 + $0xa0] sm:$0xff]
    %v143 = vld [vmem:[%s1 + $0xa8] sm:$0xff]
    %v144 = vld [vmem:[%s1 + $0xb0] sm:$0xff]
    %v145 = vld [vmem:[%s1 + $0xb8] sm:$0xff]
    %v146 = vld [vmem:[%s1 + $0xc0] sm:$0xff]
    %v147 = vld [vmem:[%s2] sm:$0xff]
    %v148 = vld [vmem:[%s2 + $0x8] sm:$0xff]
    %v149 = vld [vmem:[%s2 + $0x10] sm:$0xff]
    %v150 = vld [vmem:[%s2 + $0x18] sm:$0xff]
    %v151 = vld [vmem:[%s2 + $0x20] sm:$0xff]
    %v152 = vld [vmem:[%s2 + $0x28] sm:$0xff]
    %v153 = vld [vmem:[%s2 + $0x30] sm:$0xff]
    %v154 = vld [vmem:[%s2 + $0x38] sm:$0xff]
    %v155 = vld [vmem:[%s2 + $0x40] sm:$0xff]
    %v156 = vld [vmem:[%s2 + $0x48] sm:$0xff]
    %v157 = vld [vmem:[%s2 + $0x50] sm:$0xff]
    %v158 = vld [vmem:[%s2 + $0x58] sm:$0xff]
    %v159 = vld [vmem:[%s2 + $0x60] sm:$0xff]
    %v160 = vld [vmem:[%s2 + $0x68] sm:$0xff]
    %v161 = vld [vmem:[%s2 + $0x70] sm:$0xff]
    %v162 = vld [vmem:[%s2 + $0x78] sm:$0xff]
    %v163 = vld [vmem:[%s2 + $0x80] sm:$0xff]
    %v164 = vld [vmem:[%s2 + $0x88] sm:$0xff]
    %v165 = vld [vmem:[%s2 + $0x90] sm:$0xff]
    %v166 = vld [vmem:[%s2 + $0x98] sm:$0xff]
    %v167 = vld [vmem:[%s2 + $0xa0] sm:$0xff]
    %v168 = vld [vmem:[%s2 + $0xa8] sm:$0xff]
    %v169 = vld [vmem:[%s2 + $0xb0] sm:$0xff]
    %v170 = vld [vmem:[%s2 + $0xb8] sm:$0xff]
    %v171 = vld [vmem:[%s2 + $0xc0] sm:$0xff]
    %vm172 = vcmask 588800
    %v174 = vsel %vm172, %v73, 0
    %v177 = vsel %vm172, %v75, 0
    %v180 = vsel %vm172, %v77, 0
    %v183 = vsel %vm172, %v79, 0
    %v186 = vsel %vm172, %v81, 0
    %v189 = vsel %vm172, %v83, 0
    %v192 = vsel %vm172, %v85, 0
    %v195 = vsel %vm172, %v87, 0
    %v198 = vsel %vm172, %v89, 0
    %v201 = vsel %vm172, %v91, 0
    %v204 = vsel %vm172, %v93, 0
    %v207 = vsel %vm172, %v95, 0
    %v210 = vsel %vm172, %v97, 0
    %v213 = vsel %vm172, %v99, 0
    %v216 = vsel %vm172, %v101, 0
    %v219 = vsel %vm172, %v103, 0
    %v222 = vsel %vm172, %v105, 0
    %v225 = vsel %vm172, %v107, 0
    %v228 = vsel %vm172, %v109, 0
    %v231 = vsel %vm172, %v111, 0
    %v234 = vsel %vm172, %v113, 0
    %v237 = vsel %vm172, %v115, 0
    %v240 = vsel %vm172, %v117, 0
    %v243 = vsel %vm172, %v119, 0
    %v246 = vsel %vm172, %v121, 0
    %248 = vmatprep.subr.mxu0 0.0
    %249 = vmatpush1.msra.mxu0 %v162
    %250 = vmatprep.subr.mxu0 0.0
    %251 = vmatpush1.msra.mxu0 %v161
    %252 = vmatprep.subr.mxu0 0.0
    %253 = vmatpush1.msra.mxu0 %v160
    %254 = vmatprep.subr.mxu0 0.0
    %255 = vmatpush1.msra.mxu0 %v159
    %256 = vmatprep.subr.mxu0 0.0
    %257 = vmatpush1.msra.mxu0 %v158
    %258 = vmatprep.subr.mxu0 0.0
    %259 = vmatpush1.msra.mxu0 %v157
    %260 = vmatprep.subr.mxu0 0.0
    %261 = vmatpush1.msra.mxu0 %v156
    %262 = vmatprep.subr.mxu0 0.0
    %263 = vmatpush1.msra.mxu0 %v155
    %264 = vmatprep.subr.mxu0 0.0
    %265 = vmatpush1.msra.mxu0 %v154
    %266 = vmatprep.subr.mxu0 0.0
    %267 = vmatpush1.msra.mxu0 %v153
    %268 = vmatprep.subr.mxu0 0.0
    %269 = vmatpush1.msra.mxu0 %v152
    %270 = vmatprep.subr.mxu0 0.0
    %271 = vmatpush1.msra.mxu0 %v151
    %272 = vmatprep.subr.mxu0 0.0
    %273 = vmatpush1.msra.mxu0 %v150
    %274 = vmatprep.subr.mxu0 0.0
    %275 = vmatpush1.msra.mxu0 %v149
    %276 = vmatprep.subr.mxu0 0.0
    %277 = vmatpush1.msra.mxu0 %v148
    %278 = vmatprep.subr.mxu0 0.0
    %279 = vmatpush1.msra.mxu0 %v147
    %280 = vmatprep.subr.mxu0 0.0
    %281 = vmatpush2.msra.mxu0 0.0
    %282 = vmatprep.subr.mxu0 0.0
    %283 = vmatpush2.msra.mxu0 0.0
    %284 = vmatprep.subr.mxu0 0.0
    %285 = vmatpush2.msra.mxu0 0.0
    %286 = vmatprep.subr.mxu0 0.0
    %287 = vmatpush2.msra.mxu0 0.0
    %288 = vmatprep.subr.mxu0 0.0
    %289 = vmatpush2.msra.mxu0 0.0
    %290 = vmatprep.subr.mxu0 0.0
    %291 = vmatpush2.msra.mxu0 0.0
    %292 = vmatprep.subr.mxu0 0.0
    %293 = vmatpush2.msra.mxu0 0.0
    %294 = vmatprep.subr.mxu0 0.0
    %295 = vmatpush2.msra.mxu0 %v171
    %296 = vmatprep.subr.mxu0 0.0
    %297 = vmatpush2.msra.mxu0 %v170
    %298 = vmatprep.subr.mxu0 0.0
    %299 = vmatpush2.msra.mxu0 %v169
    %300 = vmatprep.subr.mxu0 0.0
    %301 = vmatpush2.msra.mxu0 %v168
    %302 = vmatprep.subr.mxu0 0.0
    %303 = vmatpush2.msra.mxu0 %v167
    %304 = vmatprep.subr.mxu0 0.0
    %305 = vmatpush2.msra.mxu0 %v166
    %306 = vmatprep.subr.mxu0 0.0
    %307 = vmatpush2.msra.mxu0 %v165
    %308 = vmatprep.subr.mxu0 0.0
    %309 = vmatpush2.msra.mxu0 %v164
    %310 = vmatprep.subr.mxu0 0.0
    %311 = vmatpush2.msra.mxu0 %v163
    %312 = vmatprep.mubr.f32.mxu0 %v174
    %313 = vmatmul.mubr.f32.gmra.mxu0 %v72
    %v314 = vpop.f32.mrf.mxu0
    %v315 = vadd.f32 0.0, %v314
    %v316 = vpop.f32.mrf.mxu0
    %317 = vmatprep.mubr.f32.mxu0 %v177
    %318 = vmatmul.mubr.f32.gmra.mxu0 %v74
    %v319 = vpop.f32.mrf.mxu0
    %v320 = vadd.f32 0.0, %v319
    %v321 = vpop.f32.mrf.mxu0
    %322 = vmatprep.mubr.f32.mxu0 %v180
    %323 = vmatmul.mubr.f32.gmra.mxu0 %v76
    %v324 = vpop.f32.mrf.mxu0
    %v325 = vadd.f32 0.0, %v324
    %v326 = vpop.f32.mrf.mxu0
    %327 = vmatprep.mubr.f32.mxu0 %v183
    %328 = vmatmul.mubr.f32.gmra.mxu0 %v78
    %v329 = vpop.f32.mrf.mxu0
    %v330 = vadd.f32 0.0, %v329
    %v331 = vpop.f32.mrf.mxu0
    %332 = vmatprep.mubr.f32.mxu0 %v186
    %333 = vmatmul.mubr.f32.gmra.mxu0 %v80
    %v334 = vpop.f32.mrf.mxu0
    %v335 = vadd.f32 0.0, %v334
    %v336 = vpop.f32.mrf.mxu0
    %337 = vmatprep.mubr.f32.mxu0 %v189
    %338 = vmatmul.mubr.f32.gmra.mxu0 %v82
    %v339 = vpop.f32.mrf.mxu0
    %v340 = vadd.f32 0.0, %v339
    %v341 = vpop.f32.mrf.mxu0
    %342 = vmatprep.mubr.f32.mxu0 %v192
    %343 = vmatmul.mubr.f32.gmra.mxu0 %v84
    %v344 = vpop.f32.mrf.mxu0
    %v345 = vadd.f32 0.0, %v344
    %v346 = vpop.f32.mrf.mxu0
    %347 = vmatprep.mubr.f32.mxu0 %v195
    %348 = vmatmul.mubr.f32.gmra.mxu0 %v86
    %v349 = vpop.f32.mrf.mxu0
    %v350 = vadd.f32 0.0, %v349
    %v351 = vpop.f32.mrf.mxu0
    %352 = vmatprep.mubr.f32.mxu0 %v198
    %353 = vmatmul.mubr.f32.gmra.mxu0 %v88
    %v354 = vpop.f32.mrf.mxu0
    %v355 = vadd.f32 0.0, %v354
    %v356 = vpop.f32.mrf.mxu0
    %357 = vmatprep.mubr.f32.mxu0 %v201
    %358 = vmatmul.mubr.f32.gmra.mxu0 %v90
    %v359 = vpop.f32.mrf.mxu0
    %v360 = vadd.f32 0.0, %v359
    %v361 = vpop.f32.mrf.mxu0
    %362 = vmatprep.mubr.f32.mxu0 %v204
    %363 = vmatmul.mubr.f32.gmra.mxu0 %v92
    %v364 = vpop.f32.mrf.mxu0
    %v365 = vadd.f32 0.0, %v364
    %v366 = vpop.f32.mrf.mxu0
    %367 = vmatprep.mubr.f32.mxu0 %v207
    %368 = vmatmul.mubr.f32.gmra.mxu0 %v94
    %v369 = vpop.f32.mrf.mxu0
    %v370 = vadd.f32 0.0, %v369
    %v371 = vpop.f32.mrf.mxu0
    %372 = vmatprep.mubr.f32.mxu0 %v210
    %373 = vmatmul.mubr.f32.gmra.mxu0 %v96
    %v374 = vpop.f32.mrf.mxu0
    %v375 = vadd.f32 0.0, %v374
    %v376 = vpop.f32.mrf.mxu0
    %377 = vmatprep.mubr.f32.mxu0 %v213
    %378 = vmatmul.mubr.f32.gmra.mxu0 %v98
    %v379 = vpop.f32.mrf.mxu0
    %v380 = vadd.f32 0.0, %v379
    %v381 = vpop.f32.mrf.mxu0
    %382 = vmatprep.mubr.f32.mxu0 %v216
    %383 = vmatmul.mubr.f32.gmra.mxu0 %v100
    %v384 = vpop.f32.mrf.mxu0
    %v385 = vadd.f32 0.0, %v384
    %v386 = vpop.f32.mrf.mxu0
    %387 = vmatprep.mubr.f32.mxu0 %v219
    %388 = vmatmul.mubr.f32.gmra.mxu0 %v102
    %v389 = vpop.f32.mrf.mxu0
    %v390 = vadd.f32 0.0, %v389
    %v391 = vpop.f32.mrf.mxu0
    %392 = vmatprep.mubr.f32.mxu0 %v222
    %393 = vmatmul.mubr.f32.gmra.mxu0 %v104
    %v394 = vpop.f32.mrf.mxu0
    %v395 = vadd.f32 0.0, %v394
    %v396 = vpop.f32.mrf.mxu0
    %397 = vmatprep.mubr.f32.mxu0 %v225
    %398 = vmatmul.mubr.f32.gmra.mxu0 %v106
    %v399 = vpop.f32.mrf.mxu0
    %v400 = vadd.f32 0.0, %v399
    %v401 = vpop.f32.mrf.mxu0
    %402 = vmatprep.mubr.f32.mxu0 %v228
    %403 = vmatmul.mubr.f32.gmra.mxu0 %v108
    %v404 = vpop.f32.mrf.mxu0
    %v405 = vadd.f32 0.0, %v404
    %v406 = vpop.f32.mrf.mxu0
    %407 = vmatprep.mubr.f32.mxu0 %v231
    %408 = vmatmul.mubr.f32.gmra.mxu0 %v110
    %v409 = vpop.f32.mrf.mxu0
    %v410 = vadd.f32 0.0, %v409
    %v411 = vpop.f32.mrf.mxu0
    %412 = vmatprep.mubr.f32.mxu0 %v234
    %413 = vmatmul.mubr.f32.gmra.mxu0 %v112
    %v414 = vpop.f32.mrf.mxu0
    %v415 = vadd.f32 0.0, %v414
    %v416 = vpop.f32.mrf.mxu0
    %417 = vmatprep.mubr.f32.mxu0 %v237
    %418 = vmatmul.mubr.f32.gmra.mxu0 %v114
    %v419 = vpop.f32.mrf.mxu0
    %v420 = vadd.f32 0.0, %v419
    %v421 = vpop.f32.mrf.mxu0
    %422 = vmatprep.mubr.f32.mxu0 %v240
    %423 = vmatmul.mubr.f32.gmra.mxu0 %v116
    %v424 = vpop.f32.mrf.mxu0
    %v425 = vadd.f32 0.0, %v424
    %v426 = vpop.f32.mrf.mxu0
    %427 = vmatprep.mubr.f32.mxu0 %v243
    %428 = vmatmul.mubr.f32.gmra.mxu0 %v118
    %v429 = vpop.f32.mrf.mxu0
    %v430 = vadd.f32 0.0, %v429
    %v431 = vpop.f32.mrf.mxu0
    %432 = vmatprep.mubr.f32.mxu0 %v246
    %433 = vmatmul.mubr.f32.gmra.mxu0 %v120
    %v434 = vpop.f32.mrf.mxu0
    %v435 = vadd.f32 0.0, %v434
    %v436 = vpop.f32.mrf.mxu0
    %437 = vdwg.mxu0
    %439 = vset.pattern.permute.xlu0 0
    %440 = vperm.xlu0 %439, %v122
    %v441 = vpop.permute.xlu0 %440
    %444 = vset.pattern.permute.xlu0 0
    %445 = vperm.xlu0 %444, %v123
    %v446 = vpop.permute.xlu0 %445
    %449 = vset.pattern.permute.xlu0 0
    %450 = vperm.xlu0 %449, %v124
    %v451 = vpop.permute.xlu0 %450
    %454 = vset.pattern.permute.xlu0 0
    %455 = vperm.xlu0 %454, %v125
    %v456 = vpop.permute.xlu0 %455
    %459 = vset.pattern.permute.xlu0 0
    %460 = vperm.xlu0 %459, %v126
    %v461 = vpop.permute.xlu0 %460
    %464 = vset.pattern.permute.xlu0 0
    %465 = vperm.xlu0 %464, %v127
    %v466 = vpop.permute.xlu0 %465
    %469 = vset.pattern.permute.xlu0 0
    %470 = vperm.xlu0 %469, %v128
    %v471 = vpop.permute.xlu0 %470
    %474 = vset.pattern.permute.xlu0 0
    %475 = vperm.xlu0 %474, %v129
    %v476 = vpop.permute.xlu0 %475
    %479 = vset.pattern.permute.xlu0 0
    %480 = vperm.xlu0 %479, %v130
    %v481 = vpop.permute.xlu0 %480
    %484 = vset.pattern.permute.xlu0 0
    %485 = vperm.xlu0 %484, %v131
    %v486 = vpop.permute.xlu0 %485
    %489 = vset.pattern.permute.xlu0 0
    %490 = vperm.xlu0 %489, %v132
    %v491 = vpop.permute.xlu0 %490
    %494 = vset.pattern.permute.xlu0 0
    %495 = vperm.xlu0 %494, %v133
    %v496 = vpop.permute.xlu0 %495
    %499 = vset.pattern.permute.xlu0 0
    %500 = vperm.xlu0 %499, %v134
    %v501 = vpop.permute.xlu0 %500
    %504 = vset.pattern.permute.xlu0 0
    %505 = vperm.xlu0 %504, %v135
    %v506 = vpop.permute.xlu0 %505
    %509 = vset.pattern.permute.xlu0 0
    %510 = vperm.xlu0 %509, %v136
    %v511 = vpop.permute.xlu0 %510
    %514 = vset.pattern.permute.xlu0 0
    %515 = vperm.xlu0 %514, %v137
    %v516 = vpop.permute.xlu0 %515
    %519 = vset.pattern.permute.xlu0 0
    %520 = vperm.xlu0 %519, %v138
    %v521 = vpop.permute.xlu0 %520
    %524 = vset.pattern.permute.xlu0 0
    %525 = vperm.xlu0 %524, %v139
    %v526 = vpop.permute.xlu0 %525
    %529 = vset.pattern.permute.xlu0 0
    %530 = vperm.xlu0 %529, %v140
    %v531 = vpop.permute.xlu0 %530
    %534 = vset.pattern.permute.xlu0 0
    %535 = vperm.xlu0 %534, %v141
    %v536 = vpop.permute.xlu0 %535
    %539 = vset.pattern.permute.xlu0 0
    %540 = vperm.xlu0 %539, %v142
    %v541 = vpop.permute.xlu0 %540
    %544 = vset.pattern.permute.xlu0 0
    %545 = vperm.xlu0 %544, %v143
    %v546 = vpop.permute.xlu0 %545
    %549 = vset.pattern.permute.xlu0 0
    %550 = vperm.xlu0 %549, %v144
    %v551 = vpop.permute.xlu0 %550
    %554 = vset.pattern.permute.xlu0 0
    %555 = vperm.xlu0 %554, %v145
    %v556 = vpop.permute.xlu0 %555
    %559 = vset.pattern.permute.xlu0 0
    %560 = vperm.xlu0 %559, %v146
    %v561 = vpop.permute.xlu0 %560
    %v563 = vmul.f32 %v315, %v441
    %v564 = vmul.f32 %v320, %v446
    %v565 = vmul.f32 %v325, %v451
    %v566 = vmul.f32 %v330, %v456
    %v567 = vmul.f32 %v335, %v461
    %v568 = vmul.f32 %v340, %v466
    %v569 = vmul.f32 %v345, %v471
    %v570 = vmul.f32 %v350, %v476
    %v571 = vmul.f32 %v355, %v481
    %v572 = vmul.f32 %v360, %v486
    %v573 = vmul.f32 %v365, %v491
    %v574 = vmul.f32 %v370, %v496
    %v575 = vmul.f32 %v375, %v501
    %v576 = vmul.f32 %v380, %v506
    %v577 = vmul.f32 %v385, %v511
    %v578 = vmul.f32 %v390, %v516
    %v579 = vmul.f32 %v395, %v521
    %v580 = vmul.f32 %v400, %v526
    %v581 = vmul.f32 %v405, %v531
    %v582 = vmul.f32 %v410, %v536
    %v583 = vmul.f32 %v415, %v541
    %v584 = vmul.f32 %v420, %v546
    %v585 = vmul.f32 %v425, %v551
    %v586 = vmul.f32 %v430, %v556
    %v587 = vmul.f32 %v435, %v561
    %v588 = vld [vmem:[%s3] sm:$0xff]
    %v589 = vld [vmem:[%s3 + $0x8] sm:$0xff]
    %v590 = vld [vmem:[%s4] sm:$0xff]
    %v591 = vld [vmem:[%s4 + $0x8] sm:$0xff]
    %vm592 = vcmask 130048
    %v594 = vsel %vm592, %v147, 0
    %v597 = vsel %vm592, %v148, 0
    %v600 = vsel %vm592, %v149, 0
    %v603 = vsel %vm592, %v150, 0
    %v606 = vsel %vm592, %v151, 0
    %v609 = vsel %vm592, %v152, 0
    %v612 = vsel %vm592, %v153, 0
    %v615 = vsel %vm592, %v154, 0
    %v618 = vsel %vm592, %v155, 0
    %v621 = vsel %vm592, %v156, 0
    %v624 = vsel %vm592, %v157, 0
    %v627 = vsel %vm592, %v158, 0
    %v630 = vsel %vm592, %v159, 0
    %v633 = vsel %vm592, %v160, 0
    %v636 = vsel %vm592, %v161, 0
    %v639 = vsel %vm592, %v162, 0
    %v642 = vsel %vm592, %v163, 0
    %v645 = vsel %vm592, %v164, 0
    %v648 = vsel %vm592, %v165, 0
    %v651 = vsel %vm592, %v166, 0
    %v654 = vsel %vm592, %v167, 0
    %v657 = vsel %vm592, %v168, 0
    %v660 = vsel %vm592, %v169, 0
    %v663 = vsel %vm592, %v170, 0
    %v666 = vsel %vm592, %v171, 0
    %668 = vmatprep.subr.mxu0 0.0
    %669 = vmatpush1.msra.mxu0 0.0
    %670 = vmatprep.subr.mxu0 0.0
    %671 = vmatpush1.msra.mxu0 0.0
    %672 = vmatprep.subr.mxu0 0.0
    %673 = vmatpush1.msra.mxu0 0.0
    %674 = vmatprep.subr.mxu0 0.0
    %675 = vmatpush1.msra.mxu0 0.0
    %676 = vmatprep.subr.mxu0 0.0
    %677 = vmatpush1.msra.mxu0 0.0
    %678 = vmatprep.subr.mxu0 0.0
    %679 = vmatpush1.msra.mxu0 0.0
    %680 = vmatprep.subr.mxu0 0.0
    %681 = vmatpush1.msra.mxu0 0.0
    %682 = vmatprep.subr.mxu0 0.0
    %683 = vmatpush1.msra.mxu0 0.0
    %684 = vmatprep.subr.mxu0 0.0
    %685 = vmatpush1.msra.mxu0 0.0
    %686 = vmatprep.subr.mxu0 0.0
    %687 = vmatpush1.msra.mxu0 0.0
    %688 = vmatprep.subr.mxu0 0.0
    %689 = vmatpush1.msra.mxu0 0.0
    %690 = vmatprep.subr.mxu0 0.0
    %691 = vmatpush1.msra.mxu0 0.0
    %692 = vmatprep.subr.mxu0 0.0
    %693 = vmatpush1.msra.mxu0 0.0
    %694 = vmatprep.subr.mxu0 0.0
    %695 = vmatpush1.msra.mxu0 0.0
    %696 = vmatprep.subr.mxu0 0.0
    %697 = vmatpush1.msra.mxu0 %v591
    %698 = vmatprep.subr.mxu0 0.0
    %699 = vmatpush1.msra.mxu0 %v590
    %700 = vmatprep.subr.mxu0 0.0
    %701 = vmatpush2.msra.mxu0 0.0
    %702 = vmatprep.subr.mxu0 0.0
    %703 = vmatpush2.msra.mxu0 0.0
    %704 = vmatprep.subr.mxu0 0.0
    %705 = vmatpush2.msra.mxu0 0.0
    %706 = vmatprep.subr.mxu0 0.0
    %707 = vmatpush2.msra.mxu0 0.0
    %708 = vmatprep.subr.mxu0 0.0
    %709 = vmatpush2.msra.mxu0 0.0
    %710 = vmatprep.subr.mxu0 0.0
    %711 = vmatpush2.msra.mxu0 0.0
    %712 = vmatprep.subr.mxu0 0.0
    %713 = vmatpush2.msra.mxu0 0.0
    %714 = vmatprep.subr.mxu0 0.0
    %715 = vmatpush2.msra.mxu0 0.0
    %716 = vmatprep.subr.mxu0 0.0
    %717 = vmatpush2.msra.mxu0 0.0
    %718 = vmatprep.subr.mxu0 0.0
    %719 = vmatpush2.msra.mxu0 0.0
    %720 = vmatprep.subr.mxu0 0.0
    %721 = vmatpush2.msra.mxu0 0.0
    %722 = vmatprep.subr.mxu0 0.0
    %723 = vmatpush2.msra.mxu0 0.0
    %724 = vmatprep.subr.mxu0 0.0
    %725 = vmatpush2.msra.mxu0 0.0
    %726 = vmatprep.subr.mxu0 0.0
    %727 = vmatpush2.msra.mxu0 0.0
    %728 = vmatprep.subr.mxu0 0.0
    %729 = vmatpush2.msra.mxu0 0.0
    %730 = vmatprep.subr.mxu0 0.0
    %731 = vmatpush2.msra.mxu0 0.0
    %732 = vmatprep.mubr.f32.mxu0 0.0
    %733 = vmatmul.mubr.f32.gmra.mxu0 %v594
    %v734 = vpop.f32.mrf.mxu0
    %v735 = vadd.f32 0.0, %v734
    %v736 = vpop.f32.mrf.mxu0
    %737 = vmatprep.mubr.f32.mxu0 0.0
    %738 = vmatmul.mubr.f32.gmra.mxu0 %v597
    %v739 = vpop.f32.mrf.mxu0
    %v740 = vadd.f32 0.0, %v739
    %v741 = vpop.f32.mrf.mxu0
    %742 = vmatprep.mubr.f32.mxu0 0.0
    %743 = vmatmul.mubr.f32.gmra.mxu0 %v600
    %v744 = vpop.f32.mrf.mxu0
    %v745 = vadd.f32 0.0, %v744
    %v746 = vpop.f32.mrf.mxu0
    %747 = vmatprep.mubr.f32.mxu0 0.0
    %748 = vmatmul.mubr.f32.gmra.mxu0 %v603
    %v749 = vpop.f32.mrf.mxu0
    %v750 = vadd.f32 0.0, %v749
    %v751 = vpop.f32.mrf.mxu0
    %752 = vmatprep.mubr.f32.mxu0 0.0
    %753 = vmatmul.mubr.f32.gmra.mxu0 %v606
    %v754 = vpop.f32.mrf.mxu0
    %v755 = vadd.f32 0.0, %v754
    %v756 = vpop.f32.mrf.mxu0
    %757 = vmatprep.mubr.f32.mxu0 0.0
    %758 = vmatmul.mubr.f32.gmra.mxu0 %v609
    %v759 = vpop.f32.mrf.mxu0
    %v760 = vadd.f32 0.0, %v759
    %v761 = vpop.f32.mrf.mxu0
    %762 = vmatprep.mubr.f32.mxu0 0.0
    %763 = vmatmul.mubr.f32.gmra.mxu0 %v612
    %v764 = vpop.f32.mrf.mxu0
    %v765 = vadd.f32 0.0, %v764
    %v766 = vpop.f32.mrf.mxu0
    %767 = vmatprep.mubr.f32.mxu0 0.0
    %768 = vmatmul.mubr.f32.gmra.mxu0 %v615
    %v769 = vpop.f32.mrf.mxu0
    %v770 = vadd.f32 0.0, %v769
    %v771 = vpop.f32.mrf.mxu0
    %772 = vmatprep.mubr.f32.mxu0 0.0
    %773 = vmatmul.mubr.f32.gmra.mxu0 %v618
    %v774 = vpop.f32.mrf.mxu0
    %v775 = vadd.f32 0.0, %v774
    %v776 = vpop.f32.mrf.mxu0
    %777 = vmatprep.mubr.f32.mxu0 0.0
    %778 = vmatmul.mubr.f32.gmra.mxu0 %v621
    %v779 = vpop.f32.mrf.mxu0
    %v780 = vadd.f32 0.0, %v779
    %v781 = vpop.f32.mrf.mxu0
    %782 = vmatprep.mubr.f32.mxu0 0.0
    %783 = vmatmul.mubr.f32.gmra.mxu0 %v624
    %v784 = vpop.f32.mrf.mxu0
    %v785 = vadd.f32 0.0, %v784
    %v786 = vpop.f32.mrf.mxu0
    %787 = vmatprep.mubr.f32.mxu0 0.0
    %788 = vmatmul.mubr.f32.gmra.mxu0 %v627
    %v789 = vpop.f32.mrf.mxu0
    %v790 = vadd.f32 0.0, %v789
    %v791 = vpop.f32.mrf.mxu0
    %792 = vmatprep.mubr.f32.mxu0 0.0
    %793 = vmatmul.mubr.f32.gmra.mxu0 %v630
    %v794 = vpop.f32.mrf.mxu0
    %v795 = vadd.f32 0.0, %v794
    %v796 = vpop.f32.mrf.mxu0
    %797 = vmatprep.mubr.f32.mxu0 0.0
    %798 = vmatmul.mubr.f32.gmra.mxu0 %v633
    %v799 = vpop.f32.mrf.mxu0
    %v800 = vadd.f32 0.0, %v799
    %v801 = vpop.f32.mrf.mxu0
    %802 = vmatprep.mubr.f32.mxu0 0.0
    %803 = vmatmul.mubr.f32.gmra.mxu0 %v636
    %v804 = vpop.f32.mrf.mxu0
    %v805 = vadd.f32 0.0, %v804
    %v806 = vpop.f32.mrf.mxu0
    %807 = vmatprep.mubr.f32.mxu0 0.0
    %808 = vmatmul.mubr.f32.gmra.mxu0 %v639
    %v809 = vpop.f32.mrf.mxu0
    %v810 = vadd.f32 0.0, %v809
    %v811 = vpop.f32.mrf.mxu0
    %812 = vmatprep.mubr.f32.mxu0 0.0
    %813 = vmatmul.mubr.f32.gmra.mxu0 %v642
    %v814 = vpop.f32.mrf.mxu0
    %v815 = vadd.f32 0.0, %v814
    %v816 = vpop.f32.mrf.mxu0
    %817 = vmatprep.mubr.f32.mxu0 0.0
    %818 = vmatmul.mubr.f32.gmra.mxu0 %v645
    %v819 = vpop.f32.mrf.mxu0
    %v820 = vadd.f32 0.0, %v819
    %v821 = vpop.f32.mrf.mxu0
    %822 = vmatprep.mubr.f32.mxu0 0.0
    %823 = vmatmul.mubr.f32.gmra.mxu0 %v648
    %v824 = vpop.f32.mrf.mxu0
    %v825 = vadd.f32 0.0, %v824
    %v826 = vpop.f32.mrf.mxu0
    %827 = vmatprep.mubr.f32.mxu0 0.0
    %828 = vmatmul.mubr.f32.gmra.mxu0 %v651
    %v829 = vpop.f32.mrf.mxu0
    %v830 = vadd.f32 0.0, %v829
    %v831 = vpop.f32.mrf.mxu0
    %832 = vmatprep.mubr.f32.mxu0 0.0
    %833 = vmatmul.mubr.f32.gmra.mxu0 %v654
    %v834 = vpop.f32.mrf.mxu0
    %v835 = vadd.f32 0.0, %v834
    %v836 = vpop.f32.mrf.mxu0
    %837 = vmatprep.mubr.f32.mxu0 0.0
    %838 = vmatmul.mubr.f32.gmra.mxu0 %v657
    %v839 = vpop.f32.mrf.mxu0
    %v840 = vadd.f32 0.0, %v839
    %v841 = vpop.f32.mrf.mxu0
    %842 = vmatprep.mubr.f32.mxu0 0.0
    %843 = vmatmul.mubr.f32.gmra.mxu0 %v660
    %v844 = vpop.f32.mrf.mxu0
    %v845 = vadd.f32 0.0, %v844
    %v846 = vpop.f32.mrf.mxu0
    %847 = vmatprep.mubr.f32.mxu0 0.0
    %848 = vmatmul.mubr.f32.gmra.mxu0 %v663
    %v849 = vpop.f32.mrf.mxu0
    %v850 = vadd.f32 0.0, %v849
    %v851 = vpop.f32.mrf.mxu0
    %852 = vmatprep.mubr.f32.mxu0 0.0
    %853 = vmatmul.mubr.f32.gmra.mxu0 %v666
    %v854 = vpop.f32.mrf.mxu0
    %v855 = vadd.f32 0.0, %v854
    %v856 = vpop.f32.mrf.mxu0
    %857 = vdwg.mxu0
    %v859 = vsel %vm592, %v563, 0
    %v862 = vsel %vm592, %v564, 0
    %v865 = vsel %vm592, %v565, 0
    %v868 = vsel %vm592, %v566, 0
    %v871 = vsel %vm592, %v567, 0
    %v874 = vsel %vm592, %v568, 0
    %v877 = vsel %vm592, %v569, 0
    %v880 = vsel %vm592, %v570, 0
    %v883 = vsel %vm592, %v571, 0
    %v886 = vsel %vm592, %v572, 0
    %v889 = vsel %vm592, %v573, 0
    %v892 = vsel %vm592, %v574, 0
    %v895 = vsel %vm592, %v575, 0
    %v898 = vsel %vm592, %v576, 0
    %v901 = vsel %vm592, %v577, 0
    %v904 = vsel %vm592, %v578, 0
    %v907 = vsel %vm592, %v579, 0
    %v910 = vsel %vm592, %v580, 0
    %v913 = vsel %vm592, %v581, 0
    %v916 = vsel %vm592, %v582, 0
    %v919 = vsel %vm592, %v583, 0
    %v922 = vsel %vm592, %v584, 0
    %v925 = vsel %vm592, %v585, 0
    %v928 = vsel %vm592, %v586, 0
    %v931 = vsel %vm592, %v587, 0
    %933 = vmatprep.subr.mxu0 0.0
    %934 = vmatpush1.msra.mxu0 0.0
    %935 = vmatprep.subr.mxu0 0.0
    %936 = vmatpush1.msra.mxu0 0.0
    %937 = vmatprep.subr.mxu0 0.0
    %938 = vmatpush1.msra.mxu0 0.0
    %939 = vmatprep.subr.mxu0 0.0
    %940 = vmatpush1.msra.mxu0 0.0
    %941 = vmatprep.subr.mxu0 0.0
    %942 = vmatpush1.msra.mxu0 0.0
    %943 = vmatprep.subr.mxu0 0.0
    %944 = vmatpush1.msra.mxu0 0.0
    %945 = vmatprep.subr.mxu0 0.0
    %946 = vmatpush1.msra.mxu0 0.0
    %947 = vmatprep.subr.mxu0 0.0
    %948 = vmatpush1.msra.mxu0 0.0
    %949 = vmatprep.subr.mxu0 0.0
    %950 = vmatpush1.msra.mxu0 0.0
    %951 = vmatprep.subr.mxu0 0.0
    %952 = vmatpush1.msra.mxu0 0.0
    %953 = vmatprep.subr.mxu0 0.0
    %954 = vmatpush1.msra.mxu0 0.0
    %955 = vmatprep.subr.mxu0 0.0
    %956 = vmatpush1.msra.mxu0 0.0
    %957 = vmatprep.subr.mxu0 0.0
    %958 = vmatpush1.msra.mxu0 0.0
    %959 = vmatprep.subr.mxu0 0.0
    %960 = vmatpush1.msra.mxu0 0.0
    %961 = vmatprep.subr.mxu0 0.0
    %962 = vmatpush1.msra.mxu0 %v589
    %963 = vmatprep.subr.mxu0 0.0
    %964 = vmatpush1.msra.mxu0 %v588
    %965 = vmatprep.subr.mxu0 0.0
    %966 = vmatpush2.msra.mxu0 0.0
    %967 = vmatprep.subr.mxu0 0.0
    %968 = vmatpush2.msra.mxu0 0.0
    %969 = vmatprep.subr.mxu0 0.0
    %970 = vmatpush2.msra.mxu0 0.0
    %971 = vmatprep.subr.mxu0 0.0
    %972 = vmatpush2.msra.mxu0 0.0
    %973 = vmatprep.subr.mxu0 0.0
    %974 = vmatpush2.msra.mxu0 0.0
    %975 = vmatprep.subr.mxu0 0.0
    %976 = vmatpush2.msra.mxu0 0.0
    %977 = vmatprep.subr.mxu0 0.0
    %978 = vmatpush2.msra.mxu0 0.0
    %979 = vmatprep.subr.mxu0 0.0
    %980 = vmatpush2.msra.mxu0 0.0
    %981 = vmatprep.subr.mxu0 0.0
    %982 = vmatpush2.msra.mxu0 0.0
    %983 = vmatprep.subr.mxu0 0.0
    %984 = vmatpush2.msra.mxu0 0.0
    %985 = vmatprep.subr.mxu0 0.0
    %986 = vmatpush2.msra.mxu0 0.0
    %987 = vmatprep.subr.mxu0 0.0
    %988 = vmatpush2.msra.mxu0 0.0
    %989 = vmatprep.subr.mxu0 0.0
    %990 = vmatpush2.msra.mxu0 0.0
    %991 = vmatprep.subr.mxu0 0.0
    %992 = vmatpush2.msra.mxu0 0.0
    %993 = vmatprep.subr.mxu0 0.0
    %994 = vmatpush2.msra.mxu0 0.0
    %995 = vmatprep.subr.mxu0 0.0
    %996 = vmatpush2.msra.mxu0 0.0
    %997 = vmatprep.mubr.f32.mxu0 0.0
    %998 = vmatmul.mubr.f32.gmra.mxu0 %v859
    %v999 = vpop.f32.mrf.mxu0
    %v1000 = vadd.f32 %v735, %v999
    %v1001 = vpop.f32.mrf.mxu0
    %1002 = vmatprep.mubr.f32.mxu0 0.0
    %1003 = vmatmul.mubr.f32.gmra.mxu0 %v862
    %v1004 = vpop.f32.mrf.mxu0
    %v1005 = vadd.f32 %v740, %v1004
    %v1006 = vpop.f32.mrf.mxu0
    %1007 = vmatprep.mubr.f32.mxu0 0.0
    %1008 = vmatmul.mubr.f32.gmra.mxu0 %v865
    %v1009 = vpop.f32.mrf.mxu0
    %v1010 = vadd.f32 %v745, %v1009
    %v1011 = vpop.f32.mrf.mxu0
    %1012 = vmatprep.mubr.f32.mxu0 0.0
    %1013 = vmatmul.mubr.f32.gmra.mxu0 %v868
    %v1014 = vpop.f32.mrf.mxu0
    %v1015 = vadd.f32 %v750, %v1014
    %v1016 = vpop.f32.mrf.mxu0
    %1017 = vmatprep.mubr.f32.mxu0 0.0
    %1018 = vmatmul.mubr.f32.gmra.mxu0 %v871
    %v1019 = vpop.f32.mrf.mxu0
    %v1020 = vadd.f32 %v755, %v1019
    %v1021 = vpop.f32.mrf.mxu0
    %1022 = vmatprep.mubr.f32.mxu0 0.0
    %1023 = vmatmul.mubr.f32.gmra.mxu0 %v874
    %v1024 = vpop.f32.mrf.mxu0
    %v1025 = vadd.f32 %v760, %v1024
    %v1026 = vpop.f32.mrf.mxu0
    %1027 = vmatprep.mubr.f32.mxu0 0.0
    %1028 = vmatmul.mubr.f32.gmra.mxu0 %v877
    %v1029 = vpop.f32.mrf.mxu0
    %v1030 = vadd.f32 %v765, %v1029
    %v1031 = vpop.f32.mrf.mxu0
    %1032 = vmatprep.mubr.f32.mxu0 0.0
    %1033 = vmatmul.mubr.f32.gmra.mxu0 %v880
    %v1034 = vpop.f32.mrf.mxu0
    %v1035 = vadd.f32 %v770, %v1034
    %v1036 = vpop.f32.mrf.mxu0
    %1037 = vmatprep.mubr.f32.mxu0 0.0
    %1038 = vmatmul.mubr.f32.gmra.mxu0 %v883
    %v1039 = vpop.f32.mrf.mxu0
    %v1040 = vadd.f32 %v775, %v1039
    %v1041 = vpop.f32.mrf.mxu0
    %1042 = vmatprep.mubr.f32.mxu0 0.0
    %1043 = vmatmul.mubr.f32.gmra.mxu0 %v886
    %v1044 = vpop.f32.mrf.mxu0
    %v1045 = vadd.f32 %v780, %v1044
    %v1046 = vpop.f32.mrf.mxu0
    %1047 = vmatprep.mubr.f32.mxu0 0.0
    %1048 = vmatmul.mubr.f32.gmra.mxu0 %v889
    %v1049 = vpop.f32.mrf.mxu0
    %v1050 = vadd.f32 %v785, %v1049
    %v1051 = vpop.f32.mrf.mxu0
    %1052 = vmatprep.mubr.f32.mxu0 0.0
    %1053 = vmatmul.mubr.f32.gmra.mxu0 %v892
    %v1054 = vpop.f32.mrf.mxu0
    %v1055 = vadd.f32 %v790, %v1054
    %v1056 = vpop.f32.mrf.mxu0
    %1057 = vmatprep.mubr.f32.mxu0 0.0
    %1058 = vmatmul.mubr.f32.gmra.mxu0 %v895
    %v1059 = vpop.f32.mrf.mxu0
    %v1060 = vadd.f32 %v795, %v1059
    %v1061 = vpop.f32.mrf.mxu0
    %1062 = vmatprep.mubr.f32.mxu0 0.0
    %1063 = vmatmul.mubr.f32.gmra.mxu0 %v898
    %v1064 = vpop.f32.mrf.mxu0
    %v1065 = vadd.f32 %v800, %v1064
    %v1066 = vpop.f32.mrf.mxu0
    %1067 = vmatprep.mubr.f32.mxu0 0.0
    %1068 = vmatmul.mubr.f32.gmra.mxu0 %v901
    %v1069 = vpop.f32.mrf.mxu0
    %v1070 = vadd.f32 %v805, %v1069
    %v1071 = vpop.f32.mrf.mxu0
    %1072 = vmatprep.mubr.f32.mxu0 0.0
    %1073 = vmatmul.mubr.f32.gmra.mxu0 %v904
    %v1074 = vpop.f32.mrf.mxu0
    %v1075 = vadd.f32 %v810, %v1074
    %v1076 = vpop.f32.mrf.mxu0
    %1077 = vmatprep.mubr.f32.mxu0 0.0
    %1078 = vmatmul.mubr.f32.gmra.mxu0 %v907
    %v1079 = vpop.f32.mrf.mxu0
    %v1080 = vadd.f32 %v815, %v1079
    %v1081 = vpop.f32.mrf.mxu0
    %1082 = vmatprep.mubr.f32.mxu0 0.0
    %1083 = vmatmul.mubr.f32.gmra.mxu0 %v910
    %v1084 = vpop.f32.mrf.mxu0
    %v1085 = vadd.f32 %v820, %v1084
    %v1086 = vpop.f32.mrf.mxu0
    %1087 = vmatprep.mubr.f32.mxu0 0.0
    %1088 = vmatmul.mubr.f32.gmra.mxu0 %v913
    %v1089 = vpop.f32.mrf.mxu0
    %v1090 = vadd.f32 %v825, %v1089
    %v1091 = vpop.f32.mrf.mxu0
    %1092 = vmatprep.mubr.f32.mxu0 0.0
    %1093 = vmatmul.mubr.f32.gmra.mxu0 %v916
    %v1094 = vpop.f32.mrf.mxu0
    %v1095 = vadd.f32 %v830, %v1094
    %v1096 = vpop.f32.mrf.mxu0
    %1097 = vmatprep.mubr.f32.mxu0 0.0
    %1098 = vmatmul.mubr.f32.gmra.mxu0 %v919
    %v1099 = vpop.f32.mrf.mxu0
    %v1100 = vadd.f32 %v835, %v1099
    %v1101 = vpop.f32.mrf.mxu0
    %1102 = vmatprep.mubr.f32.mxu0 0.0
    %1103 = vmatmul.mubr.f32.gmra.mxu0 %v922
    %v1104 = vpop.f32.mrf.mxu0
    %v1105 = vadd.f32 %v840, %v1104
    %v1106 = vpop.f32.mrf.mxu0
    %1107 = vmatprep.mubr.f32.mxu0 0.0
    %1108 = vmatmul.mubr.f32.gmra.mxu0 %v925
    %v1109 = vpop.f32.mrf.mxu0
    %v1110 = vadd.f32 %v845, %v1109
    %v1111 = vpop.f32.mrf.mxu0
    %1112 = vmatprep.mubr.f32.mxu0 0.0
    %1113 = vmatmul.mubr.f32.gmra.mxu0 %v928
    %v1114 = vpop.f32.mrf.mxu0
    %v1115 = vadd.f32 %v850, %v1114
    %v1116 = vpop.f32.mrf.mxu0
    %1117 = vmatprep.mubr.f32.mxu0 0.0
    %1118 = vmatmul.mubr.f32.gmra.mxu0 %v931
    %v1119 = vpop.f32.mrf.mxu0
    %v1120 = vadd.f32 %v855, %v1119
    %v1121 = vpop.f32.mrf.mxu0
    %1122 = vdwg.mxu0
    %v1123 = vld [vmem:[%s5] sm:$0x1]
    %v1125 = vlaneseq
    %v1126 = vshrl.u32 %v1125, 7
    %v1127 = vsub.s32 0, %v1126
    %v1128 = vrot.slane %v1123, %v1127
    %v1130 = vadd.f32 %v1000, %v1128
    %v1131 = vadd.f32 %v1005, %v1128
    %v1132 = vadd.f32 %v1010, %v1128
    %v1133 = vadd.f32 %v1015, %v1128
    %v1134 = vadd.f32 %v1020, %v1128
    %v1135 = vadd.f32 %v1025, %v1128
    %v1136 = vadd.f32 %v1030, %v1128
    %v1137 = vadd.f32 %v1035, %v1128
    %v1138 = vadd.f32 %v1040, %v1128
    %v1139 = vadd.f32 %v1045, %v1128
    %v1140 = vadd.f32 %v1050, %v1128
    %v1141 = vadd.f32 %v1055, %v1128
    %v1142 = vadd.f32 %v1060, %v1128
    %v1143 = vadd.f32 %v1065, %v1128
    %v1144 = vadd.f32 %v1070, %v1128
    %v1145 = vadd.f32 %v1075, %v1128
    %v1146 = vadd.f32 %v1080, %v1128
    %v1147 = vadd.f32 %v1085, %v1128
    %v1148 = vadd.f32 %v1090, %v1128
    %v1149 = vadd.f32 %v1095, %v1128
    %v1150 = vadd.f32 %v1100, %v1128
    %v1151 = vadd.f32 %v1105, %v1128
    %v1152 = vadd.f32 %v1110, %v1128
    %v1153 = vadd.f32 %v1115, %v1128
    %v1154 = vadd.f32 %v1120, %v1128
    %v1155 = vmax.f32 %v1130, 0.0
    %v1156 = vmax.f32 %v1131, 0.0
    %v1157 = vmax.f32 %v1132, 0.0
    %v1158 = vmax.f32 %v1133, 0.0
    %v1159 = vmax.f32 %v1134, 0.0
    %v1160 = vmax.f32 %v1135, 0.0
    %v1161 = vmax.f32 %v1136, 0.0
    %v1162 = vmax.f32 %v1137, 0.0
    %v1163 = vmax.f32 %v1138, 0.0
    %v1164 = vmax.f32 %v1139, 0.0
    %v1165 = vmax.f32 %v1140, 0.0
    %v1166 = vmax.f32 %v1141, 0.0
    %v1167 = vmax.f32 %v1142, 0.0
    %v1168 = vmax.f32 %v1143, 0.0
    %v1169 = vmax.f32 %v1144, 0.0
    %v1170 = vmax.f32 %v1145, 0.0
    %v1171 = vmax.f32 %v1146, 0.0
    %v1172 = vmax.f32 %v1147, 0.0
    %v1173 = vmax.f32 %v1148, 0.0
    %v1174 = vmax.f32 %v1149, 0.0
    %v1175 = vmax.f32 %v1150, 0.0
    %v1176 = vmax.f32 %v1151, 0.0
    %v1177 = vmax.f32 %v1152, 0.0
    %v1178 = vmax.f32 %v1153, 0.0
    %v1179 = vmax.f32 %v1154, 0.0
    %1180 = vmatprep.subr.mxu0 0.0
    %1181 = vmatpush1.msra.mxu0 %v1170
    %1182 = vmatprep.subr.mxu0 0.0
    %1183 = vmatpush1.msra.mxu0 %v1169
    %1184 = vmatprep.subr.mxu0 0.0
    %1185 = vmatpush1.msra.mxu0 %v1168
    %1186 = vmatprep.subr.mxu0 0.0
    %1187 = vmatpush1.msra.mxu0 %v1167
    %1188 = vmatprep.subr.mxu0 0.0
    %1189 = vmatpush1.msra.mxu0 %v1166
    %1190 = vmatprep.subr.mxu0 0.0
    %1191 = vmatpush1.msra.mxu0 %v1165
    %1192 = vmatprep.subr.mxu0 0.0
    %1193 = vmatpush1.msra.mxu0 %v1164
    %1194 = vmatprep.subr.mxu0 0.0
    %1195 = vmatpush1.msra.mxu0 %v1163
    %1196 = vmatprep.subr.mxu0 0.0
    %1197 = vmatpush1.msra.mxu0 %v1162
    %1198 = vmatprep.subr.mxu0 0.0
    %1199 = vmatpush1.msra.mxu0 %v1161
    %1200 = vmatprep.subr.mxu0 0.0
    %1201 = vmatpush1.msra.mxu0 %v1160
    %1202 = vmatprep.subr.mxu0 0.0
    %1203 = vmatpush1.msra.mxu0 %v1159
    %1204 = vmatprep.subr.mxu0 0.0
    %1205 = vmatpush1.msra.mxu0 %v1158
    %1206 = vmatprep.subr.mxu0 0.0
    %1207 = vmatpush1.msra.mxu0 %v1157
    %1208 = vmatprep.subr.mxu0 0.0
    %1209 = vmatpush1.msra.mxu0 %v1156
    %1210 = vmatprep.subr.mxu0 0.0
    %1211 = vmatpush1.msra.mxu0 %v1155
    %1212 = vmatprep.subr.mxu0 0.0
    %1213 = vmatpush2.msra.mxu0 0.0
    %1214 = vmatprep.subr.mxu0 0.0
    %1215 = vmatpush2.msra.mxu0 0.0
    %1216 = vmatprep.subr.mxu0 0.0
    %1217 = vmatpush2.msra.mxu0 0.0
    %1218 = vmatprep.subr.mxu0 0.0
    %1219 = vmatpush2.msra.mxu0 0.0
    %1220 = vmatprep.subr.mxu0 0.0
    %1221 = vmatpush2.msra.mxu0 0.0
    %1222 = vmatprep.subr.mxu0 0.0
    %1223 = vmatpush2.msra.mxu0 0.0
    %1224 = vmatprep.subr.mxu0 0.0
    %1225 = vmatpush2.msra.mxu0 0.0
    %1226 = vmatprep.subr.mxu0 0.0
    %1227 = vmatpush2.msra.mxu0 %v1179
    %1228 = vmatprep.subr.mxu0 0.0
    %1229 = vmatpush2.msra.mxu0 %v1178
    %1230 = vmatprep.subr.mxu0 0.0
    %1231 = vmatpush2.msra.mxu0 %v1177
    %1232 = vmatprep.subr.mxu0 0.0
    %1233 = vmatpush2.msra.mxu0 %v1176
    %1234 = vmatprep.subr.mxu0 0.0
    %1235 = vmatpush2.msra.mxu0 %v1175
    %1236 = vmatprep.subr.mxu0 0.0
    %1237 = vmatpush2.msra.mxu0 %v1174
    %1238 = vmatprep.subr.mxu0 0.0
    %1239 = vmatpush2.msra.mxu0 %v1173
    %1240 = vmatprep.subr.mxu0 0.0
    %1241 = vmatpush2.msra.mxu0 %v1172
    %1242 = vmatprep.subr.mxu0 0.0
    %1243 = vmatpush2.msra.mxu0 %v1171
    %1244 = vmatprep.mubr.f32.mxu0 %v174
    %1245 = vmatmul.mubr.f32.gmra.mxu0 %v72
    %v1246 = vpop.f32.mrf.mxu0
    %v1247 = vadd.f32 0.0, %v1246
    %v1248 = vpop.f32.mrf.mxu0
    %1249 = vmatprep.mubr.f32.mxu0 %v177
    %1250 = vmatmul.mubr.f32.gmra.mxu0 %v74
    %v1251 = vpop.f32.mrf.mxu0
    %v1252 = vadd.f32 0.0, %v1251
    %v1253 = vpop.f32.mrf.mxu0
    %1254 = vmatprep.mubr.f32.mxu0 %v180
    %1255 = vmatmul.mubr.f32.gmra.mxu0 %v76
    %v1256 = vpop.f32.mrf.mxu0
    %v1257 = vadd.f32 0.0, %v1256
    %v1258 = vpop.f32.mrf.mxu0
    %1259 = vmatprep.mubr.f32.mxu0 %v183
    %1260 = vmatmul.mubr.f32.gmra.mxu0 %v78
    %v1261 = vpop.f32.mrf.mxu0
    %v1262 = vadd.f32 0.0, %v1261
    %v1263 = vpop.f32.mrf.mxu0
    %1264 = vmatprep.mubr.f32.mxu0 %v186
    %1265 = vmatmul.mubr.f32.gmra.mxu0 %v80
    %v1266 = vpop.f32.mrf.mxu0
    %v1267 = vadd.f32 0.0, %v1266
    %v1268 = vpop.f32.mrf.mxu0
    %1269 = vmatprep.mubr.f32.mxu0 %v189
    %1270 = vmatmul.mubr.f32.gmra.mxu0 %v82
    %v1271 = vpop.f32.mrf.mxu0
    %v1272 = vadd.f32 0.0, %v1271
    %v1273 = vpop.f32.mrf.mxu0
    %1274 = vmatprep.mubr.f32.mxu0 %v192
    %1275 = vmatmul.mubr.f32.gmra.mxu0 %v84
    %v1276 = vpop.f32.mrf.mxu0
    %v1277 = vadd.f32 0.0, %v1276
    %v1278 = vpop.f32.mrf.mxu0
    %1279 = vmatprep.mubr.f32.mxu0 %v195
    %1280 = vmatmul.mubr.f32.gmra.mxu0 %v86
    %v1281 = vpop.f32.mrf.mxu0
    %v1282 = vadd.f32 0.0, %v1281
    %v1283 = vpop.f32.mrf.mxu0
    %1284 = vmatprep.mubr.f32.mxu0 %v198
    %1285 = vmatmul.mubr.f32.gmra.mxu0 %v88
    %v1286 = vpop.f32.mrf.mxu0
    %v1287 = vadd.f32 0.0, %v1286
    %v1288 = vpop.f32.mrf.mxu0
    %1289 = vmatprep.mubr.f32.mxu0 %v201
    %1290 = vmatmul.mubr.f32.gmra.mxu0 %v90
    %v1291 = vpop.f32.mrf.mxu0
    %v1292 = vadd.f32 0.0, %v1291
    %v1293 = vpop.f32.mrf.mxu0
    %1294 = vmatprep.mubr.f32.mxu0 %v204
    %1295 = vmatmul.mubr.f32.gmra.mxu0 %v92
    %v1296 = vpop.f32.mrf.mxu0
    %v1297 = vadd.f32 0.0, %v1296
    %v1298 = vpop.f32.mrf.mxu0
    %1299 = vmatprep.mubr.f32.mxu0 %v207
    %1300 = vmatmul.mubr.f32.gmra.mxu0 %v94
    %v1301 = vpop.f32.mrf.mxu0
    %v1302 = vadd.f32 0.0, %v1301
    %v1303 = vpop.f32.mrf.mxu0
    %1304 = vmatprep.mubr.f32.mxu0 %v210
    %1305 = vmatmul.mubr.f32.gmra.mxu0 %v96
    %v1306 = vpop.f32.mrf.mxu0
    %v1307 = vadd.f32 0.0, %v1306
    %v1308 = vpop.f32.mrf.mxu0
    %1309 = vmatprep.mubr.f32.mxu0 %v213
    %1310 = vmatmul.mubr.f32.gmra.mxu0 %v98
    %v1311 = vpop.f32.mrf.mxu0
    %v1312 = vadd.f32 0.0, %v1311
    %v1313 = vpop.f32.mrf.mxu0
    %1314 = vmatprep.mubr.f32.mxu0 %v216
    %1315 = vmatmul.mubr.f32.gmra.mxu0 %v100
    %v1316 = vpop.f32.mrf.mxu0
    %v1317 = vadd.f32 0.0, %v1316
    %v1318 = vpop.f32.mrf.mxu0
    %1319 = vmatprep.mubr.f32.mxu0 %v219
    %1320 = vmatmul.mubr.f32.gmra.mxu0 %v102
    %v1321 = vpop.f32.mrf.mxu0
    %v1322 = vadd.f32 0.0, %v1321
    %v1323 = vpop.f32.mrf.mxu0
    %1324 = vmatprep.mubr.f32.mxu0 %v222
    %1325 = vmatmul.mubr.f32.gmra.mxu0 %v104
    %v1326 = vpop.f32.mrf.mxu0
    %v1327 = vadd.f32 0.0, %v1326
    %v1328 = vpop.f32.mrf.mxu0
    %1329 = vmatprep.mubr.f32.mxu0 %v225
    %1330 = vmatmul.mubr.f32.gmra.mxu0 %v106
    %v1331 = vpop.f32.mrf.mxu0
    %v1332 = vadd.f32 0.0, %v1331
    %v1333 = vpop.f32.mrf.mxu0
    %1334 = vmatprep.mubr.f32.mxu0 %v228
    %1335 = vmatmul.mubr.f32.gmra.mxu0 %v108
    %v1336 = vpop.f32.mrf.mxu0
    %v1337 = vadd.f32 0.0, %v1336
    %v1338 = vpop.f32.mrf.mxu0
    %1339 = vmatprep.mubr.f32.mxu0 %v231
    %1340 = vmatmul.mubr.f32.gmra.mxu0 %v110
    %v1341 = vpop.f32.mrf.mxu0
    %v1342 = vadd.f32 0.0, %v1341
    %v1343 = vpop.f32.mrf.mxu0
    %1344 = vmatprep.mubr.f32.mxu0 %v234
    %1345 = vmatmul.mubr.f32.gmra.mxu0 %v112
    %v1346 = vpop.f32.mrf.mxu0
    %v1347 = vadd.f32 0.0, %v1346
    %v1348 = vpop.f32.mrf.mxu0
    %1349 = vmatprep.mubr.f32.mxu0 %v237
    %1350 = vmatmul.mubr.f32.gmra.mxu0 %v114
    %v1351 = vpop.f32.mrf.mxu0
    %v1352 = vadd.f32 0.0, %v1351
    %v1353 = vpop.f32.mrf.mxu0
    %1354 = vmatprep.mubr.f32.mxu0 %v240
    %1355 = vmatmul.mubr.f32.gmra.mxu0 %v116
    %v1356 = vpop.f32.mrf.mxu0
    %v1357 = vadd.f32 0.0, %v1356
    %v1358 = vpop.f32.mrf.mxu0
    %1359 = vmatprep.mubr.f32.mxu0 %v243
    %1360 = vmatmul.mubr.f32.gmra.mxu0 %v118
    %v1361 = vpop.f32.mrf.mxu0
    %v1362 = vadd.f32 0.0, %v1361
    %v1363 = vpop.f32.mrf.mxu0
    %1364 = vmatprep.mubr.f32.mxu0 %v246
    %1365 = vmatmul.mubr.f32.gmra.mxu0 %v120
    %v1366 = vpop.f32.mrf.mxu0
    %v1367 = vadd.f32 0.0, %v1366
    %v1368 = vpop.f32.mrf.mxu0
    %1369 = vdwg.mxu0
    %v1370 = vmul.f32 %v1247, %v441
    %v1371 = vmul.f32 %v1252, %v446
    %v1372 = vmul.f32 %v1257, %v451
    %v1373 = vmul.f32 %v1262, %v456
    %v1374 = vmul.f32 %v1267, %v461
    %v1375 = vmul.f32 %v1272, %v466
    %v1376 = vmul.f32 %v1277, %v471
    %v1377 = vmul.f32 %v1282, %v476
    %v1378 = vmul.f32 %v1287, %v481
    %v1379 = vmul.f32 %v1292, %v486
    %v1380 = vmul.f32 %v1297, %v491
    %v1381 = vmul.f32 %v1302, %v496
    %v1382 = vmul.f32 %v1307, %v501
    %v1383 = vmul.f32 %v1312, %v506
    %v1384 = vmul.f32 %v1317, %v511
    %v1385 = vmul.f32 %v1322, %v516
    %v1386 = vmul.f32 %v1327, %v521
    %v1387 = vmul.f32 %v1332, %v526
    %v1388 = vmul.f32 %v1337, %v531
    %v1389 = vmul.f32 %v1342, %v536
    %v1390 = vmul.f32 %v1347, %v541
    %v1391 = vmul.f32 %v1352, %v546
    %v1392 = vmul.f32 %v1357, %v551
    %v1393 = vmul.f32 %v1362, %v556
    %v1394 = vmul.f32 %v1367, %v561
    %v1395 = vld [vmem:[%s6] sm:$0xff]
    %v1396 = vld [vmem:[%s6 + $0x8] sm:$0xff]
    %v1397 = vld [vmem:[%s6 + $0x10] sm:$0xff]
    %v1398 = vld [vmem:[%s6 + $0x18] sm:$0xff]
    %v1399 = vld [vmem:[%s6 + $0x20] sm:$0xff]
    %v1400 = vld [vmem:[%s6 + $0x28] sm:$0xff]
    %v1401 = vld [vmem:[%s6 + $0x30] sm:$0xff]
    %v1402 = vld [vmem:[%s6 + $0x38] sm:$0xff]
    %v1403 = vld [vmem:[%s6 + $0x40] sm:$0xff]
    %v1404 = vld [vmem:[%s6 + $0x48] sm:$0xff]
    %v1405 = vld [vmem:[%s6 + $0x50] sm:$0xff]
    %v1406 = vld [vmem:[%s6 + $0x58] sm:$0xff]
    %v1407 = vld [vmem:[%s6 + $0x60] sm:$0xff]
    %v1408 = vld [vmem:[%s6 + $0x68] sm:$0xff]
    %v1409 = vld [vmem:[%s6 + $0x70] sm:$0xff]
    %v1410 = vld [vmem:[%s6 + $0x78] sm:$0xff]
    %v1411 = vld [vmem:[#allocation2] sm:$0xff]
    %v1412 = vld [vmem:[#allocation2 + $0x8] sm:$0xff]
    %v1413 = vld [vmem:[#allocation2 + $0x10] sm:$0xff]
    %v1414 = vld [vmem:[#allocation2 + $0x18] sm:$0xff]
    %v1415 = vld [vmem:[#allocation2 + $0x20] sm:$0xff]
    %v1416 = vld [vmem:[#allocation2 + $0x28] sm:$0xff]
    %v1417 = vld [vmem:[#allocation2 + $0x30] sm:$0xff]
    %v1418 = vld [vmem:[#allocation2 + $0x38] sm:$0xff]
    %v1419 = vld [vmem:[#allocation2 + $0x40] sm:$0xff]
    %v1420 = vld [vmem:[#allocation2 + $0x48] sm:$0xff]
    %v1421 = vld [vmem:[#allocation2 + $0x50] sm:$0xff]
    %v1422 = vld [vmem:[#allocation2 + $0x58] sm:$0xff]
    %v1423 = vld [vmem:[#allocation2 + $0x60] sm:$0xff]
    %v1424 = vld [vmem:[#allocation2 + $0x68] sm:$0xff]
    %v1425 = vld [vmem:[#allocation2 + $0x70] sm:$0xff]
    %v1426 = vld [vmem:[#allocation2 + $0x78] sm:$0xff]
    %1427 = vmatprep.subr.mxu0 0.0
    %1428 = vmatpush1.msra.mxu0 %v1426
    %1429 = vmatprep.subr.mxu0 0.0
    %1430 = vmatpush1.msra.mxu0 %v1425
    %1431 = vmatprep.subr.mxu0 0.0
    %1432 = vmatpush1.msra.mxu0 %v1424
    %1433 = vmatprep.subr.mxu0 0.0
    %1434 = vmatpush1.msra.mxu0 %v1423
    %1435 = vmatprep.subr.mxu0 0.0
    %1436 = vmatpush1.msra.mxu0 %v1422
    %1437 = vmatprep.subr.mxu0 0.0
    %1438 = vmatpush1.msra.mxu0 %v1421
    %1439 = vmatprep.subr.mxu0 0.0
    %1440 = vmatpush1.msra.mxu0 %v1420
    %1441 = vmatprep.subr.mxu0 0.0
    %1442 = vmatpush1.msra.mxu0 %v1419
    %1443 = vmatprep.subr.mxu0 0.0
    %1444 = vmatpush1.msra.mxu0 %v1418
    %1445 = vmatprep.subr.mxu0 0.0
    %1446 = vmatpush1.msra.mxu0 %v1417
    %1447 = vmatprep.subr.mxu0 0.0
    %1448 = vmatpush1.msra.mxu0 %v1416
    %1449 = vmatprep.subr.mxu0 0.0
    %1450 = vmatpush1.msra.mxu0 %v1415
    %1451 = vmatprep.subr.mxu0 0.0
    %1452 = vmatpush1.msra.mxu0 %v1414
    %1453 = vmatprep.subr.mxu0 0.0
    %1454 = vmatpush1.msra.mxu0 %v1413
    %1455 = vmatprep.subr.mxu0 0.0
    %1456 = vmatpush1.msra.mxu0 %v1412
    %1457 = vmatprep.subr.mxu0 0.0
    %1458 = vmatpush1.msra.mxu0 %v1411
    %1459 = vmatprep.subr.mxu0 0.0
    %1460 = vmatpush2.msra.mxu0 0.0
    %1461 = vmatprep.subr.mxu0 0.0
    %1462 = vmatpush2.msra.mxu0 0.0
    %1463 = vmatprep.subr.mxu0 0.0
    %1464 = vmatpush2.msra.mxu0 0.0
    %1465 = vmatprep.subr.mxu0 0.0
    %1466 = vmatpush2.msra.mxu0 0.0
    %1467 = vmatprep.subr.mxu0 0.0
    %1468 = vmatpush2.msra.mxu0 0.0
    %1469 = vmatprep.subr.mxu0 0.0
    %1470 = vmatpush2.msra.mxu0 0.0
    %1471 = vmatprep.subr.mxu0 0.0
    %1472 = vmatpush2.msra.mxu0 0.0
    %1473 = vmatprep.subr.mxu0 0.0
    %1474 = vmatpush2.msra.mxu0 0.0
    %1475 = vmatprep.subr.mxu0 0.0
    %1476 = vmatpush2.msra.mxu0 0.0
    %1477 = vmatprep.subr.mxu0 0.0
    %1478 = vmatpush2.msra.mxu0 0.0
    %1479 = vmatprep.subr.mxu0 0.0
    %1480 = vmatpush2.msra.mxu0 0.0
    %1481 = vmatprep.subr.mxu0 0.0
    %1482 = vmatpush2.msra.mxu0 0.0
    %1483 = vmatprep.subr.mxu0 0.0
    %1484 = vmatpush2.msra.mxu0 0.0
    %1485 = vmatprep.subr.mxu0 0.0
    %1486 = vmatpush2.msra.mxu0 0.0
    %1487 = vmatprep.subr.mxu0 0.0
    %1488 = vmatpush2.msra.mxu0 0.0
    %1489 = vmatprep.subr.mxu0 0.0
    %1490 = vmatpush2.msra.mxu0 0.0
    %1491 = vmatprep.mubr.f32.mxu0 0.0
    %1492 = vmatmul.mubr.f32.gmra.mxu0 %v1155
    %v1493 = vpop.f32.mrf.mxu0
    %v1494 = vadd.f32 0.0, %v1493
    %v1495 = vpop.f32.mrf.mxu0
    %1496 = vmatprep.mubr.f32.mxu0 0.0
    %1497 = vmatmul.mubr.f32.gmra.mxu0 %v1156
    %v1498 = vpop.f32.mrf.mxu0
    %v1499 = vadd.f32 0.0, %v1498
    %v1500 = vpop.f32.mrf.mxu0
    %1501 = vmatprep.mubr.f32.mxu0 0.0
    %1502 = vmatmul.mubr.f32.gmra.mxu0 %v1157
    %v1503 = vpop.f32.mrf.mxu0
    %v1504 = vadd.f32 0.0, %v1503
    %v1505 = vpop.f32.mrf.mxu0
    %1506 = vmatprep.mubr.f32.mxu0 0.0
    %1507 = vmatmul.mubr.f32.gmra.mxu0 %v1158
    %v1508 = vpop.f32.mrf.mxu0
    %v1509 = vadd.f32 0.0, %v1508
    %v1510 = vpop.f32.mrf.mxu0
    %1511 = vmatprep.mubr.f32.mxu0 0.0
    %1512 = vmatmul.mubr.f32.gmra.mxu0 %v1159
    %v1513 = vpop.f32.mrf.mxu0
    %v1514 = vadd.f32 0.0, %v1513
    %v1515 = vpop.f32.mrf.mxu0
    %1516 = vmatprep.mubr.f32.mxu0 0.0
    %1517 = vmatmul.mubr.f32.gmra.mxu0 %v1160
    %v1518 = vpop.f32.mrf.mxu0
    %v1519 = vadd.f32 0.0, %v1518
    %v1520 = vpop.f32.mrf.mxu0
    %1521 = vmatprep.mubr.f32.mxu0 0.0
    %1522 = vmatmul.mubr.f32.gmra.mxu0 %v1161
    %v1523 = vpop.f32.mrf.mxu0
    %v1524 = vadd.f32 0.0, %v1523
    %v1525 = vpop.f32.mrf.mxu0
    %1526 = vmatprep.mubr.f32.mxu0 0.0
    %1527 = vmatmul.mubr.f32.gmra.mxu0 %v1162
    %v1528 = vpop.f32.mrf.mxu0
    %v1529 = vadd.f32 0.0, %v1528
    %v1530 = vpop.f32.mrf.mxu0
    %1531 = vmatprep.mubr.f32.mxu0 0.0
    %1532 = vmatmul.mubr.f32.gmra.mxu0 %v1163
    %v1533 = vpop.f32.mrf.mxu0
    %v1534 = vadd.f32 0.0, %v1533
    %v1535 = vpop.f32.mrf.mxu0
    %1536 = vmatprep.mubr.f32.mxu0 0.0
    %1537 = vmatmul.mubr.f32.gmra.mxu0 %v1164
    %v1538 = vpop.f32.mrf.mxu0
    %v1539 = vadd.f32 0.0, %v1538
    %v1540 = vpop.f32.mrf.mxu0
    %1541 = vmatprep.mubr.f32.mxu0 0.0
    %1542 = vmatmul.mubr.f32.gmra.mxu0 %v1165
    %v1543 = vpop.f32.mrf.mxu0
    %v1544 = vadd.f32 0.0, %v1543
    %v1545 = vpop.f32.mrf.mxu0
    %1546 = vmatprep.mubr.f32.mxu0 0.0
    %1547 = vmatmul.mubr.f32.gmra.mxu0 %v1166
    %v1548 = vpop.f32.mrf.mxu0
    %v1549 = vadd.f32 0.0, %v1548
    %v1550 = vpop.f32.mrf.mxu0
    %1551 = vmatprep.mubr.f32.mxu0 0.0
    %1552 = vmatmul.mubr.f32.gmra.mxu0 %v1167
    %v1553 = vpop.f32.mrf.mxu0
    %v1554 = vadd.f32 0.0, %v1553
    %v1555 = vpop.f32.mrf.mxu0
    %1556 = vmatprep.mubr.f32.mxu0 0.0
    %1557 = vmatmul.mubr.f32.gmra.mxu0 %v1168
    %v1558 = vpop.f32.mrf.mxu0
    %v1559 = vadd.f32 0.0, %v1558
    %v1560 = vpop.f32.mrf.mxu0
    %1561 = vmatprep.mubr.f32.mxu0 0.0
    %1562 = vmatmul.mubr.f32.gmra.mxu0 %v1169
    %v1563 = vpop.f32.mrf.mxu0
    %v1564 = vadd.f32 0.0, %v1563
    %v1565 = vpop.f32.mrf.mxu0
    %1566 = vmatprep.mubr.f32.mxu0 0.0
    %1567 = vmatmul.mubr.f32.gmra.mxu0 %v1170
    %v1568 = vpop.f32.mrf.mxu0
    %v1569 = vadd.f32 0.0, %v1568
    %v1570 = vpop.f32.mrf.mxu0
    %1571 = vmatprep.mubr.f32.mxu0 0.0
    %1572 = vmatmul.mubr.f32.gmra.mxu0 %v1171
    %v1573 = vpop.f32.mrf.mxu0
    %v1574 = vadd.f32 0.0, %v1573
    %v1575 = vpop.f32.mrf.mxu0
    %1576 = vmatprep.mubr.f32.mxu0 0.0
    %1577 = vmatmul.mubr.f32.gmra.mxu0 %v1172
    %v1578 = vpop.f32.mrf.mxu0
    %v1579 = vadd.f32 0.0, %v1578
    %v1580 = vpop.f32.mrf.mxu0
    %1581 = vmatprep.mubr.f32.mxu0 0.0
    %1582 = vmatmul.mubr.f32.gmra.mxu0 %v1173
    %v1583 = vpop.f32.mrf.mxu0
    %v1584 = vadd.f32 0.0, %v1583
    %v1585 = vpop.f32.mrf.mxu0
    %1586 = vmatprep.mubr.f32.mxu0 0.0
    %1587 = vmatmul.mubr.f32.gmra.mxu0 %v1174
    %v1588 = vpop.f32.mrf.mxu0
    %v1589 = vadd.f32 0.0, %v1588
    %v1590 = vpop.f32.mrf.mxu0
    %1591 = vmatprep.mubr.f32.mxu0 0.0
    %1592 = vmatmul.mubr.f32.gmra.mxu0 %v1175
    %v1593 = vpop.f32.mrf.mxu0
    %v1594 = vadd.f32 0.0, %v1593
    %v1595 = vpop.f32.mrf.mxu0
    %1596 = vmatprep.mubr.f32.mxu0 0.0
    %1597 = vmatmul.mubr.f32.gmra.mxu0 %v1176
    %v1598 = vpop.f32.mrf.mxu0
    %v1599 = vadd.f32 0.0, %v1598
    %v1600 = vpop.f32.mrf.mxu0
    %1601 = vmatprep.mubr.f32.mxu0 0.0
    %1602 = vmatmul.mubr.f32.gmra.mxu0 %v1177
    %v1603 = vpop.f32.mrf.mxu0
    %v1604 = vadd.f32 0.0, %v1603
    %v1605 = vpop.f32.mrf.mxu0
    %1606 = vmatprep.mubr.f32.mxu0 0.0
    %1607 = vmatmul.mubr.f32.gmra.mxu0 %v1178
    %v1608 = vpop.f32.mrf.mxu0
    %v1609 = vadd.f32 0.0, %v1608
    %v1610 = vpop.f32.mrf.mxu0
    %1611 = vmatprep.mubr.f32.mxu0 0.0
    %1612 = vmatmul.mubr.f32.gmra.mxu0 %v1179
    %v1613 = vpop.f32.mrf.mxu0
    %v1614 = vadd.f32 0.0, %v1613
    %v1615 = vpop.f32.mrf.mxu0
    %1616 = vdwg.mxu0
    %1617 = vmatprep.subr.mxu0 0.0
    %1618 = vmatpush1.msra.mxu0 %v1410
    %1619 = vmatprep.subr.mxu0 0.0
    %1620 = vmatpush1.msra.mxu0 %v1409
    %1621 = vmatprep.subr.mxu0 0.0
    %1622 = vmatpush1.msra.mxu0 %v1408
    %1623 = vmatprep.subr.mxu0 0.0
    %1624 = vmatpush1.msra.mxu0 %v1407
    %1625 = vmatprep.subr.mxu0 0.0
    %1626 = vmatpush1.msra.mxu0 %v1406
    %1627 = vmatprep.subr.mxu0 0.0
    %1628 = vmatpush1.msra.mxu0 %v1405
    %1629 = vmatprep.subr.mxu0 0.0
    %1630 = vmatpush1.msra.mxu0 %v1404
    %1631 = vmatprep.subr.mxu0 0.0
    %1632 = vmatpush1.msra.mxu0 %v1403
    %1633 = vmatprep.subr.mxu0 0.0
    %1634 = vmatpush1.msra.mxu0 %v1402
    %1635 = vmatprep.subr.mxu0 0.0
    %1636 = vmatpush1.msra.mxu0 %v1401
    %1637 = vmatprep.subr.mxu0 0.0
    %1638 = vmatpush1.msra.mxu0 %v1400
    %1639 = vmatprep.subr.mxu0 0.0
    %1640 = vmatpush1.msra.mxu0 %v1399
    %1641 = vmatprep.subr.mxu0 0.0
    %1642 = vmatpush1.msra.mxu0 %v1398
    %1643 = vmatprep.subr.mxu0 0.0
    %1644 = vmatpush1.msra.mxu0 %v1397
    %1645 = vmatprep.subr.mxu0 0.0
    %1646 = vmatpush1.msra.mxu0 %v1396
    %1647 = vmatprep.subr.mxu0 0.0
    %1648 = vmatpush1.msra.mxu0 %v1395
    %1649 = vmatprep.subr.mxu0 0.0
    %1650 = vmatpush2.msra.mxu0 0.0
    %1651 = vmatprep.subr.mxu0 0.0
    %1652 = vmatpush2.msra.mxu0 0.0
    %1653 = vmatprep.subr.mxu0 0.0
    %1654 = vmatpush2.msra.mxu0 0.0
    %1655 = vmatprep.subr.mxu0 0.0
    %1656 = vmatpush2.msra.mxu0 0.0
    %1657 = vmatprep.subr.mxu0 0.0
    %1658 = vmatpush2.msra.mxu0 0.0
    %1659 = vmatprep.subr.mxu0 0.0
    %1660 = vmatpush2.msra.mxu0 0.0
    %1661 = vmatprep.subr.mxu0 0.0
    %1662 = vmatpush2.msra.mxu0 0.0
    %1663 = vmatprep.subr.mxu0 0.0
    %1664 = vmatpush2.msra.mxu0 0.0
    %1665 = vmatprep.subr.mxu0 0.0
    %1666 = vmatpush2.msra.mxu0 0.0
    %1667 = vmatprep.subr.mxu0 0.0
    %1668 = vmatpush2.msra.mxu0 0.0
    %1669 = vmatprep.subr.mxu0 0.0
    %1670 = vmatpush2.msra.mxu0 0.0
    %1671 = vmatprep.subr.mxu0 0.0
    %1672 = vmatpush2.msra.mxu0 0.0
    %1673 = vmatprep.subr.mxu0 0.0
    %1674 = vmatpush2.msra.mxu0 0.0
    %1675 = vmatprep.subr.mxu0 0.0
    %1676 = vmatpush2.msra.mxu0 0.0
    %1677 = vmatprep.subr.mxu0 0.0
    %1678 = vmatpush2.msra.mxu0 0.0
    %1679 = vmatprep.subr.mxu0 0.0
    %1680 = vmatpush2.msra.mxu0 0.0
    %1681 = vmatprep.mubr.f32.mxu0 0.0
    %1682 = vmatmul.mubr.f32.gmra.mxu0 %v1370
    %v1683 = vpop.f32.mrf.mxu0
    %v1684 = vadd.f32 %v1494, %v1683
    %v1685 = vpop.f32.mrf.mxu0
    %1686 = vmatprep.mubr.f32.mxu0 0.0
    %1687 = vmatmul.mubr.f32.gmra.mxu0 %v1371
    %v1688 = vpop.f32.mrf.mxu0
    %v1689 = vadd.f32 %v1499, %v1688
    %v1690 = vpop.f32.mrf.mxu0
    %1691 = vmatprep.mubr.f32.mxu0 0.0
    %1692 = vmatmul.mubr.f32.gmra.mxu0 %v1372
    %v1693 = vpop.f32.mrf.mxu0
    %v1694 = vadd.f32 %v1504, %v1693
    %v1695 = vpop.f32.mrf.mxu0
    %1696 = vmatprep.mubr.f32.mxu0 0.0
    %1697 = vmatmul.mubr.f32.gmra.mxu0 %v1373
    %v1698 = vpop.f32.mrf.mxu0
    %v1699 = vadd.f32 %v1509, %v1698
    %v1700 = vpop.f32.mrf.mxu0
    %1701 = vmatprep.mubr.f32.mxu0 0.0
    %1702 = vmatmul.mubr.f32.gmra.mxu0 %v1374
    %v1703 = vpop.f32.mrf.mxu0
    %v1704 = vadd.f32 %v1514, %v1703
    %v1705 = vpop.f32.mrf.mxu0
    %1706 = vmatprep.mubr.f32.mxu0 0.0
    %1707 = vmatmul.mubr.f32.gmra.mxu0 %v1375
    %v1708 = vpop.f32.mrf.mxu0
    %v1709 = vadd.f32 %v1519, %v1708
    %v1710 = vpop.f32.mrf.mxu0
    %1711 = vmatprep.mubr.f32.mxu0 0.0
    %1712 = vmatmul.mubr.f32.gmra.mxu0 %v1376
    %v1713 = vpop.f32.mrf.mxu0
    %v1714 = vadd.f32 %v1524, %v1713
    %v1715 = vpop.f32.mrf.mxu0
    %1716 = vmatprep.mubr.f32.mxu0 0.0
    %1717 = vmatmul.mubr.f32.gmra.mxu0 %v1377
    %v1718 = vpop.f32.mrf.mxu0
    %v1719 = vadd.f32 %v1529, %v1718
    %v1720 = vpop.f32.mrf.mxu0
    %1721 = vmatprep.mubr.f32.mxu0 0.0
    %1722 = vmatmul.mubr.f32.gmra.mxu0 %v1378
    %v1723 = vpop.f32.mrf.mxu0
    %v1724 = vadd.f32 %v1534, %v1723
    %v1725 = vpop.f32.mrf.mxu0
    %1726 = vmatprep.mubr.f32.mxu0 0.0
    %1727 = vmatmul.mubr.f32.gmra.mxu0 %v1379
    %v1728 = vpop.f32.mrf.mxu0
    %v1729 = vadd.f32 %v1539, %v1728
    %v1730 = vpop.f32.mrf.mxu0
    %1731 = vmatprep.mubr.f32.mxu0 0.0
    %1732 = vmatmul.mubr.f32.gmra.mxu0 %v1380
    %v1733 = vpop.f32.mrf.mxu0
    %v1734 = vadd.f32 %v1544, %v1733
    %v1735 = vpop.f32.mrf.mxu0
    %1736 = vmatprep.mubr.f32.mxu0 0.0
    %1737 = vmatmul.mubr.f32.gmra.mxu0 %v1381
    %v1738 = vpop.f32.mrf.mxu0
    %v1739 = vadd.f32 %v1549, %v1738
    %v1740 = vpop.f32.mrf.mxu0
    %1741 = vmatprep.mubr.f32.mxu0 0.0
    %1742 = vmatmul.mubr.f32.gmra.mxu0 %v1382
    %v1743 = vpop.f32.mrf.mxu0
    %v1744 = vadd.f32 %v1554, %v1743
    %v1745 = vpop.f32.mrf.mxu0
    %1746 = vmatprep.mubr.f32.mxu0 0.0
    %1747 = vmatmul.mubr.f32.gmra.mxu0 %v1383
    %v1748 = vpop.f32.mrf.mxu0
    %v1749 = vadd.f32 %v1559, %v1748
    %v1750 = vpop.f32.mrf.mxu0
    %1751 = vmatprep.mubr.f32.mxu0 0.0
    %1752 = vmatmul.mubr.f32.gmra.mxu0 %v1384
    %v1753 = vpop.f32.mrf.mxu0
    %v1754 = vadd.f32 %v1564, %v1753
    %v1755 = vpop.f32.mrf.mxu0
    %1756 = vmatprep.mubr.f32.mxu0 0.0
    %1757 = vmatmul.mubr.f32.gmra.mxu0 %v1385
    %v1758 = vpop.f32.mrf.mxu0
    %v1759 = vadd.f32 %v1569, %v1758
    %v1760 = vpop.f32.mrf.mxu0
    %1761 = vmatprep.mubr.f32.mxu0 0.0
    %1762 = vmatmul.mubr.f32.gmra.mxu0 %v1386
    %v1763 = vpop.f32.mrf.mxu0
    %v1764 = vadd.f32 %v1574, %v1763
    %v1765 = vpop.f32.mrf.mxu0
    %1766 = vmatprep.mubr.f32.mxu0 0.0
    %1767 = vmatmul.mubr.f32.gmra.mxu0 %v1387
    %v1768 = vpop.f32.mrf.mxu0
    %v1769 = vadd.f32 %v1579, %v1768
    %v1770 = vpop.f32.mrf.mxu0
    %1771 = vmatprep.mubr.f32.mxu0 0.0
    %1772 = vmatmul.mubr.f32.gmra.mxu0 %v1388
    %v1773 = vpop.f32.mrf.mxu0
    %v1774 = vadd.f32 %v1584, %v1773
    %v1775 = vpop.f32.mrf.mxu0
    %1776 = vmatprep.mubr.f32.mxu0 0.0
    %1777 = vmatmul.mubr.f32.gmra.mxu0 %v1389
    %v1778 = vpop.f32.mrf.mxu0
    %v1779 = vadd.f32 %v1589, %v1778
    %v1780 = vpop.f32.mrf.mxu0
    %1781 = vmatprep.mubr.f32.mxu0 0.0
    %1782 = vmatmul.mubr.f32.gmra.mxu0 %v1390
    %v1783 = vpop.f32.mrf.mxu0
    %v1784 = vadd.f32 %v1594, %v1783
    %v1785 = vpop.f32.mrf.mxu0
    %1786 = vmatprep.mubr.f32.mxu0 0.0
    %1787 = vmatmul.mubr.f32.gmra.mxu0 %v1391
    %v1788 = vpop.f32.mrf.mxu0
    %v1789 = vadd.f32 %v1599, %v1788
    %v1790 = vpop.f32.mrf.mxu0
    %1791 = vmatprep.mubr.f32.mxu0 0.0
    %1792 = vmatmul.mubr.f32.gmra.mxu0 %v1392
    %v1793 = vpop.f32.mrf.mxu0
    %v1794 = vadd.f32 %v1604, %v1793
    %v1795 = vpop.f32.mrf.mxu0
    %1796 = vmatprep.mubr.f32.mxu0 0.0
    %1797 = vmatmul.mubr.f32.gmra.mxu0 %v1393
    %v1798 = vpop.f32.mrf.mxu0
    %v1799 = vadd.f32 %v1609, %v1798
    %v1800 = vpop.f32.mrf.mxu0
    %1801 = vmatprep.mubr.f32.mxu0 0.0
    %1802 = vmatmul.mubr.f32.gmra.mxu0 %v1394
    %v1803 = vpop.f32.mrf.mxu0
    %v1804 = vadd.f32 %v1614, %v1803
    %v1805 = vpop.f32.mrf.mxu0
    %1806 = vdwg.mxu0
    %v1807 = vld [vmem:[%s8] sm:$0x1]
    %v1809 = vlaneseq
    %v1810 = vshrl.u32 %v1809, 7
    %v1811 = vsub.s32 0, %v1810
    %v1812 = vrot.slane %v1807, %v1811
    %v1814 = vadd.f32 %v1684, %v1812
    %v1815 = vadd.f32 %v1689, %v1812
    %v1816 = vadd.f32 %v1694, %v1812
    %v1817 = vadd.f32 %v1699, %v1812
    %v1818 = vadd.f32 %v1704, %v1812
    %v1819 = vadd.f32 %v1709, %v1812
    %v1820 = vadd.f32 %v1714, %v1812
    %v1821 = vadd.f32 %v1719, %v1812
    %v1822 = vadd.f32 %v1724, %v1812
    %v1823 = vadd.f32 %v1729, %v1812
    %v1824 = vadd.f32 %v1734, %v1812
    %v1825 = vadd.f32 %v1739, %v1812
    %v1826 = vadd.f32 %v1744, %v1812
    %v1827 = vadd.f32 %v1749, %v1812
    %v1828 = vadd.f32 %v1754, %v1812
    %v1829 = vadd.f32 %v1759, %v1812
    %v1830 = vadd.f32 %v1764, %v1812
    %v1831 = vadd.f32 %v1769, %v1812
    %v1832 = vadd.f32 %v1774, %v1812
    %v1833 = vadd.f32 %v1779, %v1812
    %v1834 = vadd.f32 %v1784, %v1812
    %v1835 = vadd.f32 %v1789, %v1812
    %v1836 = vadd.f32 %v1794, %v1812
    %v1837 = vadd.f32 %v1799, %v1812
    %v1838 = vadd.f32 %v1804, %v1812
    %1839 = vst [vmem:[#allocation5] sm:$0xff] %v1814
    %1840 = vst [vmem:[#allocation5 + $0x8] sm:$0xff] %v1815
    %1841 = vst [vmem:[#allocation5 + $0x10] sm:$0xff] %v1816
    %1842 = vst [vmem:[#allocation5 + $0x18] sm:$0xff] %v1817
    %1843 = vst [vmem:[#allocation5 + $0x20] sm:$0xff] %v1818
    %1844 = vst [vmem:[#allocation5 + $0x28] sm:$0xff] %v1819
    %1845 = vst [vmem:[#allocation5 + $0x30] sm:$0xff] %v1820
    %1846 = vst [vmem:[#allocation5 + $0x38] sm:$0xff] %v1821
    %1847 = vst [vmem:[#allocation5 + $0x40] sm:$0xff] %v1822
    %1848 = vst [vmem:[#allocation5 + $0x48] sm:$0xff] %v1823
    %1849 = vst [vmem:[#allocation5 + $0x50] sm:$0xff] %v1824
    %1850 = vst [vmem:[#allocation5 + $0x58] sm:$0xff] %v1825
    %1851 = vst [vmem:[#allocation5 + $0x60] sm:$0xff] %v1826
    %1852 = vst [vmem:[#allocation5 + $0x68] sm:$0xff] %v1827
    %1853 = vst [vmem:[#allocation5 + $0x70] sm:$0xff] %v1828
    %1854 = vst [vmem:[#allocation5 + $0x78] sm:$0xff] %v1829
    %1855 = vst [vmem:[#allocation5 + $0x80] sm:$0xff] %v1830
    %1856 = vst [vmem:[#allocation5 + $0x88] sm:$0xff] %v1831
    %1857 = vst [vmem:[#allocation5 + $0x90] sm:$0xff] %v1832
    %1858 = vst [vmem:[#allocation5 + $0x98] sm:$0xff] %v1833
    %1859 = vst [vmem:[#allocation5 + $0xa0] sm:$0xff] %v1834
    %1860 = vst [vmem:[#allocation5 + $0xa8] sm:$0xff] %v1835
    %1861 = vst [vmem:[#allocation5 + $0xb0] sm:$0xff] %v1836
    %1862 = vst [vmem:[#allocation5 + $0xb8] sm:$0xff] %v1837
    %1863 = vst [vmem:[#allocation5 + $0xc0] sm:$0xff] %v1838
    // Predicated region
    $region42: #{tpu_custom_call.1} parent=1 // pred_check
      _
    $region43: #{tpu_custom_call.1} parent=1 // pred_check_branch
      %1865 = sbr.rel (0) target = $region45
    $region44: #{tpu_custom_call.1} parent=1 // pred_region
      %s1867 = ssub.s32 3200, 3200
      %1868 = vsyncadd [#allocation4], %s1867
      %s1869 = sshll.u32 [#allocation5], 4
      %s1870 = int_to_ptr.vmem [resolvable:$true] %s1869
      %1875 = dma.vmem_to_hbm [thread:$0]  %s1870, 3200, %s9, [#allocation4], 128, 128, 8
    $region45: #{tpu_custom_call.1} parent=1 // pred_fallthru
      _
    // Predicated region
    $region46: #{tpu_custom_call.1} parent=1 // pred_check
      _
    $region47: #{tpu_custom_call.1} parent=1 // pred_check_branch
      %1877 = sbr.rel (0) target = $region49
    $region48: #{tpu_custom_call.1} parent=1 // pred_region
      %1878 = dma.done [#allocation4], 3200
    $region49: #{tpu_custom_call.1} parent=1 // pred_fallthru
      _
    %1879 = vsyncpa [#allocation3], 1
    %1880 = vsyncpa [#allocation4], 1

</llo_original>
